<compile_context>
chip_gen: v7x
topology: tpu7x:2x2x1
jax: 0.10.0
libtpu: 0.0.40
codegen_flags: <defaults>
</compile_context>

<pallas_src>
import math

import jax
import jax.numpy as jnp
from jax.experimental import pallas as pl
from jax.experimental.pallas import tpu as pltpu


# ---------------------------------------------------------------------------
# Fused kernel: all encoder levels in one pallas_call.
# ---------------------------------------------------------------------------
def _make_encoder_kernel(level_cfgs, N, eps, use_mxu):
    num_levels = len(level_cfgs)

    def kernel(*refs):
        # refs layout:
        #   [0]                      x_ref  (C0, N*L0)                (act dtype)
        #   [1+5l .. 5+5l]           pos, w, bias, gamma, beta        (level l)
        #   [1 + 5*num_levels]       o_ref  (C_last, N*L_last)        f32
        #   [2 + 5*num_levels ...]   act_l  (Cin_l, pad_l + N*L_l)    scratch
        x_ref = refs[0]
        o_ref = refs[1 + 5 * num_levels]
        acts = refs[2 + 5 * num_levels:]

        # Stage the input into the level-0 slab: one global causal left pad of
        # `pad0` zero columns followed by the whole (C0, N*L0) slab. Two wide
        # stores total (zero only the pad sliver, never the full buffer).
        cfg0 = level_cfgs[0]
        act0 = acts[0]
        if cfg0["pad"] > 0:
            act0[:, :cfg0["pad"]] = jnp.zeros((cfg0["Cin"], cfg0["pad"]), act0.dtype)
        act0[:, cfg0["pad"]:] = x_ref[...]

        for l, cfg in enumerate(level_cfgs):
            pos_ref, w_ref, b_ref, g_ref, bt_ref = refs[1 + 5 * l: 6 + 5 * l]
            act = acts[l]
            Cin, Cout = cfg["Cin"], cfg["Cout"]
            K, d, pad = cfg["K"], cfg["d"], cfg["pad"]
            L, Lh = cfg["L"], cfg["Lh"]
            NL, NLh = N * L, N * Lh

            pos = pos_ref[...]            # (1, NL) int32: position within sample

            # Causal dilated Conv1d as K accumulating tap contributions.
            # Tap j reads the slab shifted right by (pad - j*d); output columns
            # whose receptive field would cross a sample boundary (p < pad - j*d)
            # are zeroed with a 0/1 lane mask — equivalent to the per-sample
            # zero padding + Chomp of the PyTorch block.
            acc = None
            for j in range(K):
                s = pad - j * d                      # causal right-shift of tap j
                off = j * d
                if use_mxu:
                    # bf16 operands, f32 accumulator (MXU native throughput).
                    v = act[:, off:off + NL]                     # (Cin, NL)
                    if s > 0:
                        v = v * (pos >= s).astype(v.dtype)
                    c = jnp.dot(w_ref[j], v,                     # (Cout,Cin)x(Cin,NL)
                                preferred_element_type=jnp.float32)
                    acc = c if acc is None else acc + c
                else:
                    # Tiny channels: skip the MXU, VPU rank-1 updates in f32.
                    keep = (pos >= s).astype(jnp.float32) if s > 0 else None
                    for cin in range(Cin):
                        row = act[cin:cin + 1, off:off + NL]      # (1, NL)
                        if keep is not None:
                            row = row * keep
                        c = w_ref[j, cin] * row                   # (Cout,1)*(1,NL)
                        acc = c if acc is None else acc + c

            # bias + ReLU   (Dropout == identity)
            y = jnp.maximum(acc + b_ref[...], 0.0)                # (Cout, NL) f32

            # AvgPool1d(2) on the VPU; pairs never straddle sample boundaries
            # because L is even.
            yp = jnp.sum(y.reshape(Cout, NLh, 2), axis=-1) * 0.5  # (Cout, NLh)

            # One-pass training-mode BatchNorm1d (biased var), folded affine.
            inv_n = 1.0 / float(NLh)
            mean = jnp.sum(yp, axis=1, keepdims=True) * inv_n
            msq = jnp.sum(yp * yp, axis=1, keepdims=True) * inv_n
            var = jnp.maximum(msq - mean * mean, 0.0)
            scale = g_ref[...] * jax.lax.rsqrt(var + eps)         # (Cout, 1)
            shift = bt_ref[...] - mean * scale
            out = yp * scale + shift                              # (Cout, NLh) f32

            if l + 1 < num_levels:
                nxt_cfg = level_cfgs[l + 1]
                nxt = acts[l + 1]
                if nxt_cfg["pad"] > 0:                 # zero only the pad sliver
                    nxt[:, :nxt_cfg["pad"]] = jnp.zeros((Cout, nxt_cfg["pad"]),
                                                        nxt.dtype)
                nxt[:, nxt_cfg["pad"]:] = out.astype(nxt.dtype)   # one wide store
            else:
                o_ref[...] = out.astype(o_ref.dtype)              # one wide store

    return kernel


def encoder_p_forward(x, params, kernel_size, eps=1e-5):
    """x: (N, C, L) NCL like the PyTorch module. Returns (N, C_last, L / 2**levels)."""
    N, C0, L0 = x.shape
    num_levels = len(params)

    # Static compute-path choice: tiny channels -> VPU f32; wide channels ->
    # K accumulating bf16 MXU matmuls (f32 accumulate) + bf16 activation slabs.
    max_ch = max([int(C0)] + [int(w.shape[0]) for (w, _, _, _) in params])
    use_mxu = max_ch > 32
    act_dtype = jnp.bfloat16 if use_mxu else jnp.float32

    # Static per-level configuration.
    level_cfgs = []
    Cin, L = C0, L0
    for lvl, (w, _, _, _) in enumerate(params):
        Cout = int(w.shape[0])
        d = 2 ** lvl
        pad = (kernel_size - 1) * d
        assert L % 2 == 0, "AvgPool1d(2) path requires an even length per level"
        level_cfgs.append(dict(Cin=Cin, Cout=Cout, K=kernel_size, d=d,
                               L=L, Lh=L // 2, pad=pad))
        Cin, L = Cout, L // 2
    C_last, L_last = Cin, L

    # Lane-dense channel-major input slab (C0, N*L0).
    x_cm = jnp.transpose(x, (1, 0, 2)).reshape(C0, N * L0).astype(act_dtype)

    w_idx_map = (lambda g: (0, 0, 0)) if use_mxu else (lambda g: (0, 0, 0, 0))

    inputs = [x_cm]
    in_specs = [pl.BlockSpec((C0, N * L0), lambda g: (0, 0))]
    flops = 0
    trans = 0
    for cfg, (w, b, gamma, beta) in zip(level_cfgs, params):
        Cout, Cin_l, K, L_l = cfg["Cout"], cfg["Cin"], cfg["K"], cfg["L"]
        NL = N * L_l
        # Position-within-sample vector for the per-tap causal mask.
        pos = (jnp.arange(NL, dtype=jnp.int32) % L_l).reshape(1, NL)
        if use_mxu:
            # (K, Cout, Cin) bf16: w_ref[j] feeds the MXU directly.
            w_prep = jnp.transpose(w, (2, 0, 1)).astype(jnp.bfloat16)
        else:
            # (K, Cin, Cout, 1) f32: w_ref[j, cin] is a (Cout, 1) column for the
            # VPU rank-1 update — no in-kernel reshapes/transposes needed.
            w_prep = jnp.transpose(w, (2, 1, 0))[..., None].astype(jnp.float32)
        inputs += [pos, w_prep,
                   b.reshape(Cout, 1).astype(jnp.float32),
                   gamma.reshape(Cout, 1).astype(jnp.float32),
                   beta.reshape(Cout, 1).astype(jnp.float32)]
        in_specs += [pl.BlockSpec(pos.shape, lambda g: (0, 0)),
                     pl.BlockSpec(w_prep.shape, w_idx_map),
                     pl.BlockSpec((Cout, 1), lambda g: (0, 0)),
                     pl.BlockSpec((Cout, 1), lambda g: (0, 0)),
                     pl.BlockSpec((Cout, 1), lambda g: (0, 0))]
        flops += 2 * Cout * Cin_l * K * NL + 10 * Cout * NL
        trans += Cout

    # Per-level activation slab scratch (no K*Cin im2col slabs anymore).
    scratch_shapes = [pltpu.VMEM((cfg["Cin"], cfg["pad"] + N * cfg["L"]), act_dtype)
                      for cfg in level_cfgs]

    itemsize = jnp.dtype(act_dtype).itemsize
    scratch_bytes = sum(cfg["Cin"] * (cfg["pad"] + N * cfg["L"])
                        for cfg in level_cfgs) * itemsize
    in_bytes = sum(int(a.size) * a.dtype.itemsize for a in inputs)
    out_bytes = C_last * N * L_last * 4
    # Explicit VMEM budget: footprint (x2 for double-buffered in/out windows)
    # plus headroom, capped well under physical VMEM on every generation.
    vmem_limit = int(min(32 * 1024 * 1024,
                         2 * (in_bytes + out_bytes) + scratch_bytes
                         + 4 * 1024 * 1024))

    kernel = _make_encoder_kernel(level_cfgs, N, eps, use_mxu)

    out_cm = pl.pallas_call(
        kernel,
        out_shape=jax.ShapeDtypeStruct((C_last, N * L_last), jnp.float32),
        grid=(1,),
        in_specs=in_specs,
        out_specs=pl.BlockSpec((C_last, N * L_last), lambda g: (0, 0)),
        scratch_shapes=scratch_shapes,
        compiler_params=pltpu.CompilerParams(
            dimension_semantics=("arbitrary",),
            vmem_limit_bytes=vmem_limit),
        cost_estimate=pl.CostEstimate(flops=flops, transcendentals=trans,
                                      bytes_accessed=in_bytes + out_bytes),
    )(*inputs)

    return jnp.transpose(out_cm.reshape(C_last, N, L_last), (1, 0, 2))


# ---------------------------------------------------------------------------
# Parameter init + plain-JAX reference.
# ---------------------------------------------------------------------------
def init_params(key, input_channel, hidden_layers, kernel_size):
    """Deterministic PyTorch-style Conv1d init + identity BatchNorm affine."""
    params = []
    in_ch = input_channel
    for out_ch in hidden_layers:
        key, kw, kb = jax.random.split(key, 3)
        bound = 1.0 / math.sqrt(in_ch * kernel_size)
        w = jax.random.uniform(kw, (out_ch, in_ch, kernel_size), jnp.float32,
                               -bound, bound)
        b = jax.random.uniform(kb, (out_ch,), jnp.float32, -bound, bound)
        gamma = jnp.ones((out_ch,), jnp.float32)
        beta = jnp.zeros((out_ch,), jnp.float32)
        params.append((w, b, gamma, beta))
        in_ch = out_ch
    return params


def ref_forward(x, params, kernel_size, eps=1e-5):
    """Plain-JAX reference of the same forward pass (NCL)."""
    h = x.astype(jnp.float32)
    for lvl, (w, b, gamma, beta) in enumerate(params):
        d = 2 ** lvl
        pad = (kernel_size - 1) * d
        N, Cin, L = h.shape
        hp = jnp.pad(h, ((0, 0), (0, 0), (pad, 0)))
        y = jnp.zeros((N, w.shape[0], L), jnp.float32)
        for j in range(kernel_size):
            y = y + jnp.einsum('oi,nil->nol', w[:, :, j], hp[:, :, j * d:j * d + L])
        y = jnp.maximum(y + b[None, :, None], 0.0)
        y = y.reshape(N, w.shape[0], L // 2, 2).mean(-1)
        mean = y.mean(axis=(0, 2), keepdims=True)
        var = ((y - mean) ** 2).mean(axis=(0, 2), keepdims=True)
        h = (y - mean) * jax.lax.rsqrt(var + eps) * gamma[None, :, None] \
            + beta[None, :, None]
    return h


if __name__ == "__main__":
    # EncoderP(input_channel=4, hidden_layers=[8, 16], kernel_size=3, dropout=0.0)
    input_channel, hidden_layers, kernel_size = 4, [8, 16], 3

    key = jax.random.PRNGKey(0)
    kx, kp = jax.random.split(key)
    x = jax.random.normal(kx, (2, input_channel, 16), jnp.float32)   # NCL

    params = init_params(kp, input_channel, hidden_layers, kernel_size)

    out = encoder_p_forward(x, params, kernel_size)
    out = jax.block_until_ready(out)

    assert out.shape == (2, hidden_layers[-1], 16 // (2 ** len(hidden_layers)))

    ref = ref_forward(x, params, kernel_size)
    assert jnp.allclose(out, ref, atol=1e-3, rtol=1e-3), \
        f"max abs err {float(jnp.max(jnp.abs(out - ref)))}"

    print("KERNEL_OK")
</pallas_src>

<mosaic_0001>
module attributes {stable_mosaic.version = 11 : i64} {
  func.func @kernel(%arg0: i32, %arg1: memref<4x32xf32, #tpu.memory_space<vmem>>, %arg2: memref<1x32xi32, #tpu.memory_space<vmem>>, %arg3: memref<3x4x8x1xf32, #tpu.memory_space<vmem>>, %arg4: memref<8x1xf32, #tpu.memory_space<vmem>>, %arg5: memref<8x1xf32, #tpu.memory_space<vmem>>, %arg6: memref<8x1xf32, #tpu.memory_space<vmem>>, %arg7: memref<1x16xi32, #tpu.memory_space<vmem>>, %arg8: memref<3x8x16x1xf32, #tpu.memory_space<vmem>>, %arg9: memref<16x1xf32, #tpu.memory_space<vmem>>, %arg10: memref<16x1xf32, #tpu.memory_space<vmem>>, %arg11: memref<16x1xf32, #tpu.memory_space<vmem>>, %arg12: memref<16x8xf32, #tpu.memory_space<vmem>>, %arg13: memref<4x34xf32, #tpu.memory_space<vmem>>, %arg14: memref<8x20xf32, #tpu.memory_space<vmem>>) attributes {dimension_semantics = [#tpu.dimension_semantics<arbitrary>], iteration_bounds = array<i64: 1>, scalar_prefetch = 0 : i64, scratch_operands = 2 : i64, tpu.core_type = #tpu.core_type<tc>, window_params = [{pipeline_mode = #tpu.pipeline_mode<synchronous>, transform_indices = @transform_0, window_bounds = array<i64: 4, 32>}, {pipeline_mode = #tpu.pipeline_mode<synchronous>, transform_indices = @transform_1, window_bounds = array<i64: 1, 32>}, {pipeline_mode = #tpu.pipeline_mode<synchronous>, transform_indices = @transform_2, window_bounds = array<i64: 3, 4, 8, 1>}, {pipeline_mode = #tpu.pipeline_mode<synchronous>, transform_indices = @transform_3, window_bounds = array<i64: 8, 1>}, {pipeline_mode = #tpu.pipeline_mode<synchronous>, transform_indices = @transform_4, window_bounds = array<i64: 8, 1>}, {pipeline_mode = #tpu.pipeline_mode<synchronous>, transform_indices = @transform_5, window_bounds = array<i64: 8, 1>}, {pipeline_mode = #tpu.pipeline_mode<synchronous>, transform_indices = @transform_6, window_bounds = array<i64: 1, 16>}, {pipeline_mode = #tpu.pipeline_mode<synchronous>, transform_indices = @transform_7, window_bounds = array<i64: 3, 8, 16, 1>}, {pipeline_mode = #tpu.pipeline_mode<synchronous>, transform_indices = @transform_8, window_bounds = array<i64: 16, 1>}, {pipeline_mode = #tpu.pipeline_mode<synchronous>, transform_indices = @transform_9, window_bounds = array<i64: 16, 1>}, {pipeline_mode = #tpu.pipeline_mode<synchronous>, transform_indices = @transform_10, window_bounds = array<i64: 16, 1>}, {pipeline_mode = #tpu.pipeline_mode<synchronous>, transform_indices = @transform_11, window_bounds = array<i64: 16, 8>}]} {
    %cst = arith.constant 0.000000e+00 : f32
    %0 = vector.broadcast %cst : f32 to vector<4x2xf32>
    %c0 = arith.constant 0 : index
    %c0_0 = arith.constant 0 : index
    %1 = vector.load %arg13[%c0, %c0_0] : memref<4x34xf32, #tpu.memory_space<vmem>>, vector<4x2xf32>
    tpu.vector_store %arg13[%c0, %c0_0], %0 {strides = array<i32>} : memref<4x34xf32, #tpu.memory_space<vmem>>, vector<4x2xf32>,
    %c0_1 = arith.constant 0 : index
    %c0_2 = arith.constant 0 : index
    %2 = vector.load %arg1[%c0_1, %c0_2] : memref<4x32xf32, #tpu.memory_space<vmem>>, vector<4x32xf32>
    %c0_3 = arith.constant 0 : index
    %c2 = arith.constant 2 : index
    %3 = vector.load %arg13[%c0_3, %c2] : memref<4x34xf32, #tpu.memory_space<vmem>>, vector<4x32xf32>
    tpu.vector_store %arg13[%c0_3, %c2], %2 {strides = array<i32>} : memref<4x34xf32, #tpu.memory_space<vmem>>, vector<4x32xf32>,
    %c0_4 = arith.constant 0 : index
    %c0_5 = arith.constant 0 : index
    %4 = vector.load %arg2[%c0_4, %c0_5] : memref<1x32xi32, #tpu.memory_space<vmem>>, vector<1x32xi32>
    %c2_i32 = arith.constant 2 : i32
    %5 = vector.broadcast %c2_i32 : i32 to vector<1x32xi32>
    %6 = arith.cmpi sge, %4, %5 : vector<1x32xi32>
    %7 = arith.extui %6 : vector<1x32xi1> to vector<1x32xi32>
    %8 = arith.sitofp %7 : vector<1x32xi32> to vector<1x32xf32>
    %c0_6 = arith.constant 0 : index
    %c0_7 = arith.constant 0 : index
    %9 = vector.load %arg13[%c0_6, %c0_7] : memref<4x34xf32, #tpu.memory_space<vmem>>, vector<1x32xf32>
    %10 = arith.mulf %9, %8 : vector<1x32xf32>
    %c0_8 = arith.constant 0 : index
    %c0_9 = arith.constant 0 : index
    %c0_10 = arith.constant 0 : index
    %c0_11 = arith.constant 0 : index
    %11 = vector.load %arg3[%c0_8, %c0_9, %c0_10, %c0_11] : memref<3x4x8x1xf32, #tpu.memory_space<vmem>>, vector<1x1x8x1xf32>
    %12 = vector.shape_cast %11 : vector<1x1x8x1xf32> to vector<8x1xf32>
    %13 = vector.broadcast %12 : vector<8x1xf32> to vector<8x32xf32>
    %14 = vector.broadcast %10 : vector<1x32xf32> to vector<8x32xf32>
    %15 = arith.mulf %13, %14 : vector<8x32xf32>
    %c1 = arith.constant 1 : index
    %c0_12 = arith.constant 0 : index
    %16 = vector.load %arg13[%c1, %c0_12] : memref<4x34xf32, #tpu.memory_space<vmem>>, vector<1x32xf32>
    %17 = arith.mulf %16, %8 : vector<1x32xf32>
    %c0_13 = arith.constant 0 : index
    %c1_14 = arith.constant 1 : index
    %c0_15 = arith.constant 0 : index
    %c0_16 = arith.constant 0 : index
    %18 = vector.load %arg3[%c0_13, %c1_14, %c0_15, %c0_16] : memref<3x4x8x1xf32, #tpu.memory_space<vmem>>, vector<1x1x8x1xf32>
    %19 = vector.shape_cast %18 : vector<1x1x8x1xf32> to vector<8x1xf32>
    %20 = vector.broadcast %19 : vector<8x1xf32> to vector<8x32xf32>
    %21 = vector.broadcast %17 : vector<1x32xf32> to vector<8x32xf32>
    %22 = arith.mulf %20, %21 : vector<8x32xf32>
    %23 = arith.addf %15, %22 : vector<8x32xf32>
    %c2_17 = arith.constant 2 : index
    %c0_18 = arith.constant 0 : index
    %24 = vector.load %arg13[%c2_17, %c0_18] : memref<4x34xf32, #tpu.memory_space<vmem>>, vector<1x32xf32>
    %25 = arith.mulf %24, %8 : vector<1x32xf32>
    %c0_19 = arith.constant 0 : index
    %c2_20 = arith.constant 2 : index
    %c0_21 = arith.constant 0 : index
    %c0_22 = arith.constant 0 : index
    %26 = vector.load %arg3[%c0_19, %c2_20, %c0_21, %c0_22] : memref<3x4x8x1xf32, #tpu.memory_space<vmem>>, vector<1x1x8x1xf32>
    %27 = vector.shape_cast %26 : vector<1x1x8x1xf32> to vector<8x1xf32>
    %28 = vector.broadcast %27 : vector<8x1xf32> to vector<8x32xf32>
    %29 = vector.broadcast %25 : vector<1x32xf32> to vector<8x32xf32>
    %30 = arith.mulf %28, %29 : vector<8x32xf32>
    %31 = arith.addf %23, %30 : vector<8x32xf32>
    %c3 = arith.constant 3 : index
    %c0_23 = arith.constant 0 : index
    %32 = vector.load %arg13[%c3, %c0_23] : memref<4x34xf32, #tpu.memory_space<vmem>>, vector<1x32xf32>
    %33 = arith.mulf %32, %8 : vector<1x32xf32>
    %c0_24 = arith.constant 0 : index
    %c3_25 = arith.constant 3 : index
    %c0_26 = arith.constant 0 : index
    %c0_27 = arith.constant 0 : index
    %34 = vector.load %arg3[%c0_24, %c3_25, %c0_26, %c0_27] : memref<3x4x8x1xf32, #tpu.memory_space<vmem>>, vector<1x1x8x1xf32>
    %35 = vector.shape_cast %34 : vector<1x1x8x1xf32> to vector<8x1xf32>
    %36 = vector.broadcast %35 : vector<8x1xf32> to vector<8x32xf32>
    %37 = vector.broadcast %33 : vector<1x32xf32> to vector<8x32xf32>
    %38 = arith.mulf %36, %37 : vector<8x32xf32>
    %39 = arith.addf %31, %38 : vector<8x32xf32>
    %c1_i32 = arith.constant 1 : i32
    %40 = vector.broadcast %c1_i32 : i32 to vector<1x32xi32>
    %41 = arith.cmpi sge, %4, %40 : vector<1x32xi32>
    %42 = arith.extui %41 : vector<1x32xi1> to vector<1x32xi32>
    %43 = arith.sitofp %42 : vector<1x32xi32> to vector<1x32xf32>
    %c0_28 = arith.constant 0 : index
    %c1_29 = arith.constant 1 : index
    %44 = vector.load %arg13[%c0_28, %c1_29] : memref<4x34xf32, #tpu.memory_space<vmem>>, vector<1x32xf32>
    %45 = arith.mulf %44, %43 : vector<1x32xf32>
    %c1_30 = arith.constant 1 : index
    %c0_31 = arith.constant 0 : index
    %c0_32 = arith.constant 0 : index
    %c0_33 = arith.constant 0 : index
    %46 = vector.load %arg3[%c1_30, %c0_31, %c0_32, %c0_33] : memref<3x4x8x1xf32, #tpu.memory_space<vmem>>, vector<1x1x8x1xf32>
    %47 = vector.shape_cast %46 : vector<1x1x8x1xf32> to vector<8x1xf32>
    %48 = vector.broadcast %47 : vector<8x1xf32> to vector<8x32xf32>
    %49 = vector.broadcast %45 : vector<1x32xf32> to vector<8x32xf32>
    %50 = arith.mulf %48, %49 : vector<8x32xf32>
    %51 = arith.addf %39, %50 : vector<8x32xf32>
    %c1_34 = arith.constant 1 : index
    %c1_35 = arith.constant 1 : index
    %52 = vector.load %arg13[%c1_34, %c1_35] : memref<4x34xf32, #tpu.memory_space<vmem>>, vector<1x32xf32>
    %53 = arith.mulf %52, %43 : vector<1x32xf32>
    %c1_36 = arith.constant 1 : index
    %c1_37 = arith.constant 1 : index
    %c0_38 = arith.constant 0 : index
    %c0_39 = arith.constant 0 : index
    %54 = vector.load %arg3[%c1_36, %c1_37, %c0_38, %c0_39] : memref<3x4x8x1xf32, #tpu.memory_space<vmem>>, vector<1x1x8x1xf32>
    %55 = vector.shape_cast %54 : vector<1x1x8x1xf32> to vector<8x1xf32>
    %56 = vector.broadcast %55 : vector<8x1xf32> to vector<8x32xf32>
    %57 = vector.broadcast %53 : vector<1x32xf32> to vector<8x32xf32>
    %58 = arith.mulf %56, %57 : vector<8x32xf32>
    %59 = arith.addf %51, %58 : vector<8x32xf32>
    %c2_40 = arith.constant 2 : index
    %c1_41 = arith.constant 1 : index
    %60 = vector.load %arg13[%c2_40, %c1_41] : memref<4x34xf32, #tpu.memory_space<vmem>>, vector<1x32xf32>
    %61 = arith.mulf %60, %43 : vector<1x32xf32>
    %c1_42 = arith.constant 1 : index
    %c2_43 = arith.constant 2 : index
    %c0_44 = arith.constant 0 : index
    %c0_45 = arith.constant 0 : index
    %62 = vector.load %arg3[%c1_42, %c2_43, %c0_44, %c0_45] : memref<3x4x8x1xf32, #tpu.memory_space<vmem>>, vector<1x1x8x1xf32>
    %63 = vector.shape_cast %62 : vector<1x1x8x1xf32> to vector<8x1xf32>
    %64 = vector.broadcast %63 : vector<8x1xf32> to vector<8x32xf32>
    %65 = vector.broadcast %61 : vector<1x32xf32> to vector<8x32xf32>
    %66 = arith.mulf %64, %65 : vector<8x32xf32>
    %67 = arith.addf %59, %66 : vector<8x32xf32>
    %c3_46 = arith.constant 3 : index
    %c1_47 = arith.constant 1 : index
    %68 = vector.load %arg13[%c3_46, %c1_47] : memref<4x34xf32, #tpu.memory_space<vmem>>, vector<1x32xf32>
    %69 = arith.mulf %68, %43 : vector<1x32xf32>
    %c1_48 = arith.constant 1 : index
    %c3_49 = arith.constant 3 : index
    %c0_50 = arith.constant 0 : index
    %c0_51 = arith.constant 0 : index
    %70 = vector.load %arg3[%c1_48, %c3_49, %c0_50, %c0_51] : memref<3x4x8x1xf32, #tpu.memory_space<vmem>>, vector<1x1x8x1xf32>
    %71 = vector.shape_cast %70 : vector<1x1x8x1xf32> to vector<8x1xf32>
    %72 = vector.broadcast %71 : vector<8x1xf32> to vector<8x32xf32>
    %73 = vector.broadcast %69 : vector<1x32xf32> to vector<8x32xf32>
    %74 = arith.mulf %72, %73 : vector<8x32xf32>
    %75 = arith.addf %67, %74 : vector<8x32xf32>
    %c0_52 = arith.constant 0 : index
    %c2_53 = arith.constant 2 : index
    %76 = vector.load %arg13[%c0_52, %c2_53] : memref<4x34xf32, #tpu.memory_space<vmem>>, vector<1x32xf32>
    %c2_54 = arith.constant 2 : index
    %c0_55 = arith.constant 0 : index
    %c0_56 = arith.constant 0 : index
    %c0_57 = arith.constant 0 : index
    %77 = vector.load %arg3[%c2_54, %c0_55, %c0_56, %c0_57] : memref<3x4x8x1xf32, #tpu.memory_space<vmem>>, vector<1x1x8x1xf32>
    %78 = vector.shape_cast %77 : vector<1x1x8x1xf32> to vector<8x1xf32>
    %79 = vector.broadcast %78 : vector<8x1xf32> to vector<8x32xf32>
    %80 = vector.broadcast %76 : vector<1x32xf32> to vector<8x32xf32>
    %81 = arith.mulf %79, %80 : vector<8x32xf32>
    %82 = arith.addf %75, %81 : vector<8x32xf32>
    %c1_58 = arith.constant 1 : index
    %c2_59 = arith.constant 2 : index
    %83 = vector.load %arg13[%c1_58, %c2_59] : memref<4x34xf32, #tpu.memory_space<vmem>>, vector<1x32xf32>
    %c2_60 = arith.constant 2 : index
    %c1_61 = arith.constant 1 : index
    %c0_62 = arith.constant 0 : index
    %c0_63 = arith.constant 0 : index
    %84 = vector.load %arg3[%c2_60, %c1_61, %c0_62, %c0_63] : memref<3x4x8x1xf32, #tpu.memory_space<vmem>>, vector<1x1x8x1xf32>
    %85 = vector.shape_cast %84 : vector<1x1x8x1xf32> to vector<8x1xf32>
    %86 = vector.broadcast %85 : vector<8x1xf32> to vector<8x32xf32>
    %87 = vector.broadcast %83 : vector<1x32xf32> to vector<8x32xf32>
    %88 = arith.mulf %86, %87 : vector<8x32xf32>
    %89 = arith.addf %82, %88 : vector<8x32xf32>
    %c2_64 = arith.constant 2 : index
    %c2_65 = arith.constant 2 : index
    %90 = vector.load %arg13[%c2_64, %c2_65] : memref<4x34xf32, #tpu.memory_space<vmem>>, vector<1x32xf32>
    %c2_66 = arith.constant 2 : index
    %c2_67 = arith.constant 2 : index
    %c0_68 = arith.constant 0 : index
    %c0_69 = arith.constant 0 : index
    %91 = vector.load %arg3[%c2_66, %c2_67, %c0_68, %c0_69] : memref<3x4x8x1xf32, #tpu.memory_space<vmem>>, vector<1x1x8x1xf32>
    %92 = vector.shape_cast %91 : vector<1x1x8x1xf32> to vector<8x1xf32>
    %93 = vector.broadcast %92 : vector<8x1xf32> to vector<8x32xf32>
    %94 = vector.broadcast %90 : vector<1x32xf32> to vector<8x32xf32>
    %95 = arith.mulf %93, %94 : vector<8x32xf32>
    %96 = arith.addf %89, %95 : vector<8x32xf32>
    %c3_70 = arith.constant 3 : index
    %c2_71 = arith.constant 2 : index
    %97 = vector.load %arg13[%c3_70, %c2_71] : memref<4x34xf32, #tpu.memory_space<vmem>>, vector<1x32xf32>
    %c2_72 = arith.constant 2 : index
    %c3_73 = arith.constant 3 : index
    %c0_74 = arith.constant 0 : index
    %c0_75 = arith.constant 0 : index
    %98 = vector.load %arg3[%c2_72, %c3_73, %c0_74, %c0_75] : memref<3x4x8x1xf32, #tpu.memory_space<vmem>>, vector<1x1x8x1xf32>
    %99 = vector.shape_cast %98 : vector<1x1x8x1xf32> to vector<8x1xf32>
    %100 = vector.broadcast %99 : vector<8x1xf32> to vector<8x32xf32>
    %101 = vector.broadcast %97 : vector<1x32xf32> to vector<8x32xf32>
    %102 = arith.mulf %100, %101 : vector<8x32xf32>
    %103 = arith.addf %96, %102 : vector<8x32xf32>
    %c0_76 = arith.constant 0 : index
    %c0_77 = arith.constant 0 : index
    %104 = vector.load %arg4[%c0_76, %c0_77] : memref<8x1xf32, #tpu.memory_space<vmem>>, vector<8x1xf32>
    %105 = vector.broadcast %104 : vector<8x1xf32> to vector<8x32xf32>
    %106 = arith.addf %103, %105 : vector<8x32xf32>
    %cst_78 = arith.constant 0.000000e+00 : f32
    %107 = vector.broadcast %cst_78 : f32 to vector<8x32xf32>
    %108 = arith.maximumf %106, %107 : vector<8x32xf32>
    %109 = vector.shape_cast %108 : vector<8x32xf32> to vector<8x16x2xf32>
    %cst_79 = arith.constant dense<0.000000e+00> : vector<8x16xf32>
    %110 = vector.multi_reduction <add>, %109, %cst_79 [2] : vector<8x16x2xf32> to vector<8x16xf32>
    %cst_80 = arith.constant 5.000000e-01 : f32
    %111 = vector.broadcast %cst_80 : f32 to vector<8x16xf32>
    %112 = arith.mulf %110, %111 : vector<8x16xf32>
    %cst_81 = arith.constant dense<0.000000e+00> : vector<8xf32>
    %113 = vector.multi_reduction <add>, %112, %cst_81 [1] : vector<8x16xf32> to vector<8xf32>
    %114 = vector.shape_cast %113 : vector<8xf32> to vector<8x1xf32>
    %cst_82 = arith.constant 6.250000e-02 : f32
    %115 = vector.broadcast %cst_82 : f32 to vector<8x1xf32>
    %116 = arith.mulf %114, %115 : vector<8x1xf32>
    %117 = arith.mulf %112, %112 : vector<8x16xf32>
    %cst_83 = arith.constant dense<0.000000e+00> : vector<8xf32>
    %118 = vector.multi_reduction <add>, %117, %cst_83 [1] : vector<8x16xf32> to vector<8xf32>
    %119 = vector.shape_cast %118 : vector<8xf32> to vector<8x1xf32>
    %cst_84 = arith.constant 6.250000e-02 : f32
    %120 = vector.broadcast %cst_84 : f32 to vector<8x1xf32>
    %121 = arith.mulf %119, %120 : vector<8x1xf32>
    %122 = arith.mulf %116, %116 : vector<8x1xf32>
    %123 = arith.subf %121, %122 : vector<8x1xf32>
    %cst_85 = arith.constant 0.000000e+00 : f32
    %124 = vector.broadcast %cst_85 : f32 to vector<8x1xf32>
    %125 = arith.maximumf %123, %124 : vector<8x1xf32>
    %c0_86 = arith.constant 0 : index
    %c0_87 = arith.constant 0 : index
    %126 = vector.load %arg5[%c0_86, %c0_87] : memref<8x1xf32, #tpu.memory_space<vmem>>, vector<8x1xf32>
    %cst_88 = arith.constant 9.99999974E-6 : f32
    %127 = vector.broadcast %cst_88 : f32 to vector<8x1xf32>
    %128 = arith.addf %125, %127 : vector<8x1xf32>
    %129 = math.rsqrt %128 : vector<8x1xf32>
    %130 = arith.mulf %126, %129 : vector<8x1xf32>
    %c0_89 = arith.constant 0 : index
    %c0_90 = arith.constant 0 : index
    %131 = vector.load %arg6[%c0_89, %c0_90] : memref<8x1xf32, #tpu.memory_space<vmem>>, vector<8x1xf32>
    %132 = arith.mulf %116, %130 : vector<8x1xf32>
    %133 = arith.subf %131, %132 : vector<8x1xf32>
    %134 = vector.broadcast %130 : vector<8x1xf32> to vector<8x16xf32>
    %135 = arith.mulf %112, %134 : vector<8x16xf32>
    %136 = vector.broadcast %133 : vector<8x1xf32> to vector<8x16xf32>
    %137 = arith.addf %135, %136 : vector<8x16xf32>
    %cst_91 = arith.constant 0.000000e+00 : f32
    %138 = vector.broadcast %cst_91 : f32 to vector<8x4xf32>
    %c0_92 = arith.constant 0 : index
    %c0_93 = arith.constant 0 : index
    %139 = vector.load %arg14[%c0_92, %c0_93] : memref<8x20xf32, #tpu.memory_space<vmem>>, vector<8x4xf32>
    tpu.vector_store %arg14[%c0_92, %c0_93], %138 {strides = array<i32>} : memref<8x20xf32, #tpu.memory_space<vmem>>, vector<8x4xf32>,
    %c0_94 = arith.constant 0 : index
    %c4 = arith.constant 4 : index
    %140 = vector.load %arg14[%c0_94, %c4] : memref<8x20xf32, #tpu.memory_space<vmem>>, vector<8x16xf32>
    tpu.vector_store %arg14[%c0_94, %c4], %137 {strides = array<i32>} : memref<8x20xf32, #tpu.memory_space<vmem>>, vector<8x16xf32>,
    %c0_95 = arith.constant 0 : index
    %c0_96 = arith.constant 0 : index
    %141 = vector.load %arg7[%c0_95, %c0_96] : memref<1x16xi32, #tpu.memory_space<vmem>>, vector<1x16xi32>
    %c4_i32 = arith.constant 4 : i32
    %142 = vector.broadcast %c4_i32 : i32 to vector<1x16xi32>
    %143 = arith.cmpi sge, %141, %142 : vector<1x16xi32>
    %144 = arith.extui %143 : vector<1x16xi1> to vector<1x16xi32>
    %145 = arith.sitofp %144 : vector<1x16xi32> to vector<1x16xf32>
    %c0_97 = arith.constant 0 : index
    %c0_98 = arith.constant 0 : index
    %146 = vector.load %arg14[%c0_97, %c0_98] : memref<8x20xf32, #tpu.memory_space<vmem>>, vector<1x16xf32>
    %147 = arith.mulf %146, %145 : vector<1x16xf32>
    %c0_99 = arith.constant 0 : index
    %c0_100 = arith.constant 0 : index
    %c0_101 = arith.constant 0 : index
    %c0_102 = arith.constant 0 : index
    %148 = vector.load %arg8[%c0_99, %c0_100, %c0_101, %c0_102] : memref<3x8x16x1xf32, #tpu.memory_space<vmem>>, vector<1x1x16x1xf32>
    %149 = vector.shape_cast %148 : vector<1x1x16x1xf32> to vector<16x1xf32>
    %150 = vector.broadcast %149 : vector<16x1xf32> to vector<16x16xf32>
    %151 = vector.broadcast %147 : vector<1x16xf32> to vector<16x16xf32>
    %152 = arith.mulf %150, %151 : vector<16x16xf32>
    %c1_103 = arith.constant 1 : index
    %c0_104 = arith.constant 0 : index
    %153 = vector.load %arg14[%c1_103, %c0_104] : memref<8x20xf32, #tpu.memory_space<vmem>>, vector<1x16xf32>
    %154 = arith.mulf %153, %145 : vector<1x16xf32>
    %c0_105 = arith.constant 0 : index
    %c1_106 = arith.constant 1 : index
    %c0_107 = arith.constant 0 : index
    %c0_108 = arith.constant 0 : index
    %155 = vector.load %arg8[%c0_105, %c1_106, %c0_107, %c0_108] : memref<3x8x16x1xf32, #tpu.memory_space<vmem>>, vector<1x1x16x1xf32>
    %156 = vector.shape_cast %155 : vector<1x1x16x1xf32> to vector<16x1xf32>
    %157 = vector.broadcast %156 : vector<16x1xf32> to vector<16x16xf32>
    %158 = vector.broadcast %154 : vector<1x16xf32> to vector<16x16xf32>
    %159 = arith.mulf %157, %158 : vector<16x16xf32>
    %160 = arith.addf %152, %159 : vector<16x16xf32>
    %c2_109 = arith.constant 2 : index
    %c0_110 = arith.constant 0 : index
    %161 = vector.load %arg14[%c2_109, %c0_110] : memref<8x20xf32, #tpu.memory_space<vmem>>, vector<1x16xf32>
    %162 = arith.mulf %161, %145 : vector<1x16xf32>
    %c0_111 = arith.constant 0 : index
    %c2_112 = arith.constant 2 : index
    %c0_113 = arith.constant 0 : index
    %c0_114 = arith.constant 0 : index
    %163 = vector.load %arg8[%c0_111, %c2_112, %c0_113, %c0_114] : memref<3x8x16x1xf32, #tpu.memory_space<vmem>>, vector<1x1x16x1xf32>
    %164 = vector.shape_cast %163 : vector<1x1x16x1xf32> to vector<16x1xf32>
    %165 = vector.broadcast %164 : vector<16x1xf32> to vector<16x16xf32>
    %166 = vector.broadcast %162 : vector<1x16xf32> to vector<16x16xf32>
    %167 = arith.mulf %165, %166 : vector<16x16xf32>
    %168 = arith.addf %160, %167 : vector<16x16xf32>
    %c3_115 = arith.constant 3 : index
    %c0_116 = arith.constant 0 : index
    %169 = vector.load %arg14[%c3_115, %c0_116] : memref<8x20xf32, #tpu.memory_space<vmem>>, vector<1x16xf32>
    %170 = arith.mulf %169, %145 : vector<1x16xf32>
    %c0_117 = arith.constant 0 : index
    %c3_118 = arith.constant 3 : index
    %c0_119 = arith.constant 0 : index
    %c0_120 = arith.constant 0 : index
    %171 = vector.load %arg8[%c0_117, %c3_118, %c0_119, %c0_120] : memref<3x8x16x1xf32, #tpu.memory_space<vmem>>, vector<1x1x16x1xf32>
    %172 = vector.shape_cast %171 : vector<1x1x16x1xf32> to vector<16x1xf32>
    %173 = vector.broadcast %172 : vector<16x1xf32> to vector<16x16xf32>
    %174 = vector.broadcast %170 : vector<1x16xf32> to vector<16x16xf32>
    %175 = arith.mulf %173, %174 : vector<16x16xf32>
    %176 = arith.addf %168, %175 : vector<16x16xf32>
    %c4_121 = arith.constant 4 : index
    %c0_122 = arith.constant 0 : index
    %177 = vector.load %arg14[%c4_121, %c0_122] : memref<8x20xf32, #tpu.memory_space<vmem>>, vector<1x16xf32>
    %178 = arith.mulf %177, %145 : vector<1x16xf32>
    %c0_123 = arith.constant 0 : index
    %c4_124 = arith.constant 4 : index
    %c0_125 = arith.constant 0 : index
    %c0_126 = arith.constant 0 : index
    %179 = vector.load %arg8[%c0_123, %c4_124, %c0_125, %c0_126] : memref<3x8x16x1xf32, #tpu.memory_space<vmem>>, vector<1x1x16x1xf32>
    %180 = vector.shape_cast %179 : vector<1x1x16x1xf32> to vector<16x1xf32>
    %181 = vector.broadcast %180 : vector<16x1xf32> to vector<16x16xf32>
    %182 = vector.broadcast %178 : vector<1x16xf32> to vector<16x16xf32>
    %183 = arith.mulf %181, %182 : vector<16x16xf32>
    %184 = arith.addf %176, %183 : vector<16x16xf32>
    %c5 = arith.constant 5 : index
    %c0_127 = arith.constant 0 : index
    %185 = vector.load %arg14[%c5, %c0_127] : memref<8x20xf32, #tpu.memory_space<vmem>>, vector<1x16xf32>
    %186 = arith.mulf %185, %145 : vector<1x16xf32>
    %c0_128 = arith.constant 0 : index
    %c5_129 = arith.constant 5 : index
    %c0_130 = arith.constant 0 : index
    %c0_131 = arith.constant 0 : index
    %187 = vector.load %arg8[%c0_128, %c5_129, %c0_130, %c0_131] : memref<3x8x16x1xf32, #tpu.memory_space<vmem>>, vector<1x1x16x1xf32>
    %188 = vector.shape_cast %187 : vector<1x1x16x1xf32> to vector<16x1xf32>
    %189 = vector.broadcast %188 : vector<16x1xf32> to vector<16x16xf32>
    %190 = vector.broadcast %186 : vector<1x16xf32> to vector<16x16xf32>
    %191 = arith.mulf %189, %190 : vector<16x16xf32>
    %192 = arith.addf %184, %191 : vector<16x16xf32>
    %c6 = arith.constant 6 : index
    %c0_132 = arith.constant 0 : index
    %193 = vector.load %arg14[%c6, %c0_132] : memref<8x20xf32, #tpu.memory_space<vmem>>, vector<1x16xf32>
    %194 = arith.mulf %193, %145 : vector<1x16xf32>
    %c0_133 = arith.constant 0 : index
    %c6_134 = arith.constant 6 : index
    %c0_135 = arith.constant 0 : index
    %c0_136 = arith.constant 0 : index
    %195 = vector.load %arg8[%c0_133, %c6_134, %c0_135, %c0_136] : memref<3x8x16x1xf32, #tpu.memory_space<vmem>>, vector<1x1x16x1xf32>
    %196 = vector.shape_cast %195 : vector<1x1x16x1xf32> to vector<16x1xf32>
    %197 = vector.broadcast %196 : vector<16x1xf32> to vector<16x16xf32>
    %198 = vector.broadcast %194 : vector<1x16xf32> to vector<16x16xf32>
    %199 = arith.mulf %197, %198 : vector<16x16xf32>
    %200 = arith.addf %192, %199 : vector<16x16xf32>
    %c7 = arith.constant 7 : index
    %c0_137 = arith.constant 0 : index
    %201 = vector.load %arg14[%c7, %c0_137] : memref<8x20xf32, #tpu.memory_space<vmem>>, vector<1x16xf32>
    %202 = arith.mulf %201, %145 : vector<1x16xf32>
    %c0_138 = arith.constant 0 : index
    %c7_139 = arith.constant 7 : index
    %c0_140 = arith.constant 0 : index
    %c0_141 = arith.constant 0 : index
    %203 = vector.load %arg8[%c0_138, %c7_139, %c0_140, %c0_141] : memref<3x8x16x1xf32, #tpu.memory_space<vmem>>, vector<1x1x16x1xf32>
    %204 = vector.shape_cast %203 : vector<1x1x16x1xf32> to vector<16x1xf32>
    %205 = vector.broadcast %204 : vector<16x1xf32> to vector<16x16xf32>
    %206 = vector.broadcast %202 : vector<1x16xf32> to vector<16x16xf32>
    %207 = arith.mulf %205, %206 : vector<16x16xf32>
    %208 = arith.addf %200, %207 : vector<16x16xf32>
    %c2_i32_142 = arith.constant 2 : i32
    %209 = vector.broadcast %c2_i32_142 : i32 to vector<1x16xi32>
    %210 = arith.cmpi sge, %141, %209 : vector<1x16xi32>
    %211 = arith.extui %210 : vector<1x16xi1> to vector<1x16xi32>
    %212 = arith.sitofp %211 : vector<1x16xi32> to vector<1x16xf32>
    %c0_143 = arith.constant 0 : index
    %c2_144 = arith.constant 2 : index
    %213 = vector.load %arg14[%c0_143, %c2_144] : memref<8x20xf32, #tpu.memory_space<vmem>>, vector<1x16xf32>
    %214 = arith.mulf %213, %212 : vector<1x16xf32>
    %c1_145 = arith.constant 1 : index
    %c0_146 = arith.constant 0 : index
    %c0_147 = arith.constant 0 : index
    %c0_148 = arith.constant 0 : index
    %215 = vector.load %arg8[%c1_145, %c0_146, %c0_147, %c0_148] : memref<3x8x16x1xf32, #tpu.memory_space<vmem>>, vector<1x1x16x1xf32>
    %216 = vector.shape_cast %215 : vector<1x1x16x1xf32> to vector<16x1xf32>
    %217 = vector.broadcast %216 : vector<16x1xf32> to vector<16x16xf32>
    %218 = vector.broadcast %214 : vector<1x16xf32> to vector<16x16xf32>
    %219 = arith.mulf %217, %218 : vector<16x16xf32>
    %220 = arith.addf %208, %219 : vector<16x16xf32>
    %c1_149 = arith.constant 1 : index
    %c2_150 = arith.constant 2 : index
    %221 = vector.load %arg14[%c1_149, %c2_150] : memref<8x20xf32, #tpu.memory_space<vmem>>, vector<1x16xf32>
    %222 = arith.mulf %221, %212 : vector<1x16xf32>
    %c1_151 = arith.constant 1 : index
    %c1_152 = arith.constant 1 : index
    %c0_153 = arith.constant 0 : index
    %c0_154 = arith.constant 0 : index
    %223 = vector.load %arg8[%c1_151, %c1_152, %c0_153, %c0_154] : memref<3x8x16x1xf32, #tpu.memory_space<vmem>>, vector<1x1x16x1xf32>
    %224 = vector.shape_cast %223 : vector<1x1x16x1xf32> to vector<16x1xf32>
    %225 = vector.broadcast %224 : vector<16x1xf32> to vector<16x16xf32>
    %226 = vector.broadcast %222 : vector<1x16xf32> to vector<16x16xf32>
    %227 = arith.mulf %225, %226 : vector<16x16xf32>
    %228 = arith.addf %220, %227 : vector<16x16xf32>
    %c2_155 = arith.constant 2 : index
    %c2_156 = arith.constant 2 : index
    %229 = vector.load %arg14[%c2_155, %c2_156] : memref<8x20xf32, #tpu.memory_space<vmem>>, vector<1x16xf32>
    %230 = arith.mulf %229, %212 : vector<1x16xf32>
    %c1_157 = arith.constant 1 : index
    %c2_158 = arith.constant 2 : index
    %c0_159 = arith.constant 0 : index
    %c0_160 = arith.constant 0 : index
    %231 = vector.load %arg8[%c1_157, %c2_158, %c0_159, %c0_160] : memref<3x8x16x1xf32, #tpu.memory_space<vmem>>, vector<1x1x16x1xf32>
    %232 = vector.shape_cast %231 : vector<1x1x16x1xf32> to vector<16x1xf32>
    %233 = vector.broadcast %232 : vector<16x1xf32> to vector<16x16xf32>
    %234 = vector.broadcast %230 : vector<1x16xf32> to vector<16x16xf32>
    %235 = arith.mulf %233, %234 : vector<16x16xf32>
    %236 = arith.addf %228, %235 : vector<16x16xf32>
    %c3_161 = arith.constant 3 : index
    %c2_162 = arith.constant 2 : index
    %237 = vector.load %arg14[%c3_161, %c2_162] : memref<8x20xf32, #tpu.memory_space<vmem>>, vector<1x16xf32>
    %238 = arith.mulf %237, %212 : vector<1x16xf32>
    %c1_163 = arith.constant 1 : index
    %c3_164 = arith.constant 3 : index
    %c0_165 = arith.constant 0 : index
    %c0_166 = arith.constant 0 : index
    %239 = vector.load %arg8[%c1_163, %c3_164, %c0_165, %c0_166] : memref<3x8x16x1xf32, #tpu.memory_space<vmem>>, vector<1x1x16x1xf32>
    %240 = vector.shape_cast %239 : vector<1x1x16x1xf32> to vector<16x1xf32>
    %241 = vector.broadcast %240 : vector<16x1xf32> to vector<16x16xf32>
    %242 = vector.broadcast %238 : vector<1x16xf32> to vector<16x16xf32>
    %243 = arith.mulf %241, %242 : vector<16x16xf32>
    %244 = arith.addf %236, %243 : vector<16x16xf32>
    %c4_167 = arith.constant 4 : index
    %c2_168 = arith.constant 2 : index
    %245 = vector.load %arg14[%c4_167, %c2_168] : memref<8x20xf32, #tpu.memory_space<vmem>>, vector<1x16xf32>
    %246 = arith.mulf %245, %212 : vector<1x16xf32>
    %c1_169 = arith.constant 1 : index
    %c4_170 = arith.constant 4 : index
    %c0_171 = arith.constant 0 : index
    %c0_172 = arith.constant 0 : index
    %247 = vector.load %arg8[%c1_169, %c4_170, %c0_171, %c0_172] : memref<3x8x16x1xf32, #tpu.memory_space<vmem>>, vector<1x1x16x1xf32>
    %248 = vector.shape_cast %247 : vector<1x1x16x1xf32> to vector<16x1xf32>
    %249 = vector.broadcast %248 : vector<16x1xf32> to vector<16x16xf32>
    %250 = vector.broadcast %246 : vector<1x16xf32> to vector<16x16xf32>
    %251 = arith.mulf %249, %250 : vector<16x16xf32>
    %252 = arith.addf %244, %251 : vector<16x16xf32>
    %c5_173 = arith.constant 5 : index
    %c2_174 = arith.constant 2 : index
    %253 = vector.load %arg14[%c5_173, %c2_174] : memref<8x20xf32, #tpu.memory_space<vmem>>, vector<1x16xf32>
    %254 = arith.mulf %253, %212 : vector<1x16xf32>
    %c1_175 = arith.constant 1 : index
    %c5_176 = arith.constant 5 : index
    %c0_177 = arith.constant 0 : index
    %c0_178 = arith.constant 0 : index
    %255 = vector.load %arg8[%c1_175, %c5_176, %c0_177, %c0_178] : memref<3x8x16x1xf32, #tpu.memory_space<vmem>>, vector<1x1x16x1xf32>
    %256 = vector.shape_cast %255 : vector<1x1x16x1xf32> to vector<16x1xf32>
    %257 = vector.broadcast %256 : vector<16x1xf32> to vector<16x16xf32>
    %258 = vector.broadcast %254 : vector<1x16xf32> to vector<16x16xf32>
    %259 = arith.mulf %257, %258 : vector<16x16xf32>
    %260 = arith.addf %252, %259 : vector<16x16xf32>
    %c6_179 = arith.constant 6 : index
    %c2_180 = arith.constant 2 : index
    %261 = vector.load %arg14[%c6_179, %c2_180] : memref<8x20xf32, #tpu.memory_space<vmem>>, vector<1x16xf32>
    %262 = arith.mulf %261, %212 : vector<1x16xf32>
    %c1_181 = arith.constant 1 : index
    %c6_182 = arith.constant 6 : index
    %c0_183 = arith.constant 0 : index
    %c0_184 = arith.constant 0 : index
    %263 = vector.load %arg8[%c1_181, %c6_182, %c0_183, %c0_184] : memref<3x8x16x1xf32, #tpu.memory_space<vmem>>, vector<1x1x16x1xf32>
    %264 = vector.shape_cast %263 : vector<1x1x16x1xf32> to vector<16x1xf32>
    %265 = vector.broadcast %264 : vector<16x1xf32> to vector<16x16xf32>
    %266 = vector.broadcast %262 : vector<1x16xf32> to vector<16x16xf32>
    %267 = arith.mulf %265, %266 : vector<16x16xf32>
    %268 = arith.addf %260, %267 : vector<16x16xf32>
    %c7_185 = arith.constant 7 : index
    %c2_186 = arith.constant 2 : index
    %269 = vector.load %arg14[%c7_185, %c2_186] : memref<8x20xf32, #tpu.memory_space<vmem>>, vector<1x16xf32>
    %270 = arith.mulf %269, %212 : vector<1x16xf32>
    %c1_187 = arith.constant 1 : index
    %c7_188 = arith.constant 7 : index
    %c0_189 = arith.constant 0 : index
    %c0_190 = arith.constant 0 : index
    %271 = vector.load %arg8[%c1_187, %c7_188, %c0_189, %c0_190] : memref<3x8x16x1xf32, #tpu.memory_space<vmem>>, vector<1x1x16x1xf32>
    %272 = vector.shape_cast %271 : vector<1x1x16x1xf32> to vector<16x1xf32>
    %273 = vector.broadcast %272 : vector<16x1xf32> to vector<16x16xf32>
    %274 = vector.broadcast %270 : vector<1x16xf32> to vector<16x16xf32>
    %275 = arith.mulf %273, %274 : vector<16x16xf32>
    %276 = arith.addf %268, %275 : vector<16x16xf32>
    %c0_191 = arith.constant 0 : index
    %c4_192 = arith.constant 4 : index
    %277 = vector.load %arg14[%c0_191, %c4_192] : memref<8x20xf32, #tpu.memory_space<vmem>>, vector<1x16xf32>
    %c2_193 = arith.constant 2 : index
    %c0_194 = arith.constant 0 : index
    %c0_195 = arith.constant 0 : index
    %c0_196 = arith.constant 0 : index
    %278 = vector.load %arg8[%c2_193, %c0_194, %c0_195, %c0_196] : memref<3x8x16x1xf32, #tpu.memory_space<vmem>>, vector<1x1x16x1xf32>
    %279 = vector.shape_cast %278 : vector<1x1x16x1xf32> to vector<16x1xf32>
    %280 = vector.broadcast %279 : vector<16x1xf32> to vector<16x16xf32>
    %281 = vector.broadcast %277 : vector<1x16xf32> to vector<16x16xf32>
    %282 = arith.mulf %280, %281 : vector<16x16xf32>
    %283 = arith.addf %276, %282 : vector<16x16xf32>
    %c1_197 = arith.constant 1 : index
    %c4_198 = arith.constant 4 : index
    %284 = vector.load %arg14[%c1_197, %c4_198] : memref<8x20xf32, #tpu.memory_space<vmem>>, vector<1x16xf32>
    %c2_199 = arith.constant 2 : index
    %c1_200 = arith.constant 1 : index
    %c0_201 = arith.constant 0 : index
    %c0_202 = arith.constant 0 : index
    %285 = vector.load %arg8[%c2_199, %c1_200, %c0_201, %c0_202] : memref<3x8x16x1xf32, #tpu.memory_space<vmem>>, vector<1x1x16x1xf32>
    %286 = vector.shape_cast %285 : vector<1x1x16x1xf32> to vector<16x1xf32>
    %287 = vector.broadcast %286 : vector<16x1xf32> to vector<16x16xf32>
    %288 = vector.broadcast %284 : vector<1x16xf32> to vector<16x16xf32>
    %289 = arith.mulf %287, %288 : vector<16x16xf32>
    %290 = arith.addf %283, %289 : vector<16x16xf32>
    %c2_203 = arith.constant 2 : index
    %c4_204 = arith.constant 4 : index
    %291 = vector.load %arg14[%c2_203, %c4_204] : memref<8x20xf32, #tpu.memory_space<vmem>>, vector<1x16xf32>
    %c2_205 = arith.constant 2 : index
    %c2_206 = arith.constant 2 : index
    %c0_207 = arith.constant 0 : index
    %c0_208 = arith.constant 0 : index
    %292 = vector.load %arg8[%c2_205, %c2_206, %c0_207, %c0_208] : memref<3x8x16x1xf32, #tpu.memory_space<vmem>>, vector<1x1x16x1xf32>
    %293 = vector.shape_cast %292 : vector<1x1x16x1xf32> to vector<16x1xf32>
    %294 = vector.broadcast %293 : vector<16x1xf32> to vector<16x16xf32>
    %295 = vector.broadcast %291 : vector<1x16xf32> to vector<16x16xf32>
    %296 = arith.mulf %294, %295 : vector<16x16xf32>
    %297 = arith.addf %290, %296 : vector<16x16xf32>
    %c3_209 = arith.constant 3 : index
    %c4_210 = arith.constant 4 : index
    %298 = vector.load %arg14[%c3_209, %c4_210] : memref<8x20xf32, #tpu.memory_space<vmem>>, vector<1x16xf32>
    %c2_211 = arith.constant 2 : index
    %c3_212 = arith.constant 3 : index
    %c0_213 = arith.constant 0 : index
    %c0_214 = arith.constant 0 : index
    %299 = vector.load %arg8[%c2_211, %c3_212, %c0_213, %c0_214] : memref<3x8x16x1xf32, #tpu.memory_space<vmem>>, vector<1x1x16x1xf32>
    %300 = vector.shape_cast %299 : vector<1x1x16x1xf32> to vector<16x1xf32>
    %301 = vector.broadcast %300 : vector<16x1xf32> to vector<16x16xf32>
    %302 = vector.broadcast %298 : vector<1x16xf32> to vector<16x16xf32>
    %303 = arith.mulf %301, %302 : vector<16x16xf32>
    %304 = arith.addf %297, %303 : vector<16x16xf32>
    %c4_215 = arith.constant 4 : index
    %c4_216 = arith.constant 4 : index
    %305 = vector.load %arg14[%c4_215, %c4_216] : memref<8x20xf32, #tpu.memory_space<vmem>>, vector<1x16xf32>
    %c2_217 = arith.constant 2 : index
    %c4_218 = arith.constant 4 : index
    %c0_219 = arith.constant 0 : index
    %c0_220 = arith.constant 0 : index
    %306 = vector.load %arg8[%c2_217, %c4_218, %c0_219, %c0_220] : memref<3x8x16x1xf32, #tpu.memory_space<vmem>>, vector<1x1x16x1xf32>
    %307 = vector.shape_cast %306 : vector<1x1x16x1xf32> to vector<16x1xf32>
    %308 = vector.broadcast %307 : vector<16x1xf32> to vector<16x16xf32>
    %309 = vector.broadcast %305 : vector<1x16xf32> to vector<16x16xf32>
    %310 = arith.mulf %308, %309 : vector<16x16xf32>
    %311 = arith.addf %304, %310 : vector<16x16xf32>
    %c5_221 = arith.constant 5 : index
    %c4_222 = arith.constant 4 : index
    %312 = vector.load %arg14[%c5_221, %c4_222] : memref<8x20xf32, #tpu.memory_space<vmem>>, vector<1x16xf32>
    %c2_223 = arith.constant 2 : index
    %c5_224 = arith.constant 5 : index
    %c0_225 = arith.constant 0 : index
    %c0_226 = arith.constant 0 : index
    %313 = vector.load %arg8[%c2_223, %c5_224, %c0_225, %c0_226] : memref<3x8x16x1xf32, #tpu.memory_space<vmem>>, vector<1x1x16x1xf32>
    %314 = vector.shape_cast %313 : vector<1x1x16x1xf32> to vector<16x1xf32>
    %315 = vector.broadcast %314 : vector<16x1xf32> to vector<16x16xf32>
    %316 = vector.broadcast %312 : vector<1x16xf32> to vector<16x16xf32>
    %317 = arith.mulf %315, %316 : vector<16x16xf32>
    %318 = arith.addf %311, %317 : vector<16x16xf32>
    %c6_227 = arith.constant 6 : index
    %c4_228 = arith.constant 4 : index
    %319 = vector.load %arg14[%c6_227, %c4_228] : memref<8x20xf32, #tpu.memory_space<vmem>>, vector<1x16xf32>
    %c2_229 = arith.constant 2 : index
    %c6_230 = arith.constant 6 : index
    %c0_231 = arith.constant 0 : index
    %c0_232 = arith.constant 0 : index
    %320 = vector.load %arg8[%c2_229, %c6_230, %c0_231, %c0_232] : memref<3x8x16x1xf32, #tpu.memory_space<vmem>>, vector<1x1x16x1xf32>
    %321 = vector.shape_cast %320 : vector<1x1x16x1xf32> to vector<16x1xf32>
    %322 = vector.broadcast %321 : vector<16x1xf32> to vector<16x16xf32>
    %323 = vector.broadcast %319 : vector<1x16xf32> to vector<16x16xf32>
    %324 = arith.mulf %322, %323 : vector<16x16xf32>
    %325 = arith.addf %318, %324 : vector<16x16xf32>
    %c7_233 = arith.constant 7 : index
    %c4_234 = arith.constant 4 : index
    %326 = vector.load %arg14[%c7_233, %c4_234] : memref<8x20xf32, #tpu.memory_space<vmem>>, vector<1x16xf32>
    %c2_235 = arith.constant 2 : index
    %c7_236 = arith.constant 7 : index
    %c0_237 = arith.constant 0 : index
    %c0_238 = arith.constant 0 : index
    %327 = vector.load %arg8[%c2_235, %c7_236, %c0_237, %c0_238] : memref<3x8x16x1xf32, #tpu.memory_space<vmem>>, vector<1x1x16x1xf32>
    %328 = vector.shape_cast %327 : vector<1x1x16x1xf32> to vector<16x1xf32>
    %329 = vector.broadcast %328 : vector<16x1xf32> to vector<16x16xf32>
    %330 = vector.broadcast %326 : vector<1x16xf32> to vector<16x16xf32>
    %331 = arith.mulf %329, %330 : vector<16x16xf32>
    %332 = arith.addf %325, %331 : vector<16x16xf32>
    %c0_239 = arith.constant 0 : index
    %c0_240 = arith.constant 0 : index
    %333 = vector.load %arg9[%c0_239, %c0_240] : memref<16x1xf32, #tpu.memory_space<vmem>>, vector<16x1xf32>
    %334 = vector.broadcast %333 : vector<16x1xf32> to vector<16x16xf32>
    %335 = arith.addf %332, %334 : vector<16x16xf32>
    %cst_241 = arith.constant 0.000000e+00 : f32
    %336 = vector.broadcast %cst_241 : f32 to vector<16x16xf32>
    %337 = arith.maximumf %335, %336 : vector<16x16xf32>
    %338 = vector.shape_cast %337 : vector<16x16xf32> to vector<16x8x2xf32>
    %cst_242 = arith.constant dense<0.000000e+00> : vector<16x8xf32>
    %339 = vector.multi_reduction <add>, %338, %cst_242 [2] : vector<16x8x2xf32> to vector<16x8xf32>
    %cst_243 = arith.constant 5.000000e-01 : f32
    %340 = vector.broadcast %cst_243 : f32 to vector<16x8xf32>
    %341 = arith.mulf %339, %340 : vector<16x8xf32>
    %cst_244 = arith.constant dense<0.000000e+00> : vector<16xf32>
    %342 = vector.multi_reduction <add>, %341, %cst_244 [1] : vector<16x8xf32> to vector<16xf32>
    %343 = vector.shape_cast %342 : vector<16xf32> to vector<16x1xf32>
    %cst_245 = arith.constant 1.250000e-01 : f32
    %344 = vector.broadcast %cst_245 : f32 to vector<16x1xf32>
    %345 = arith.mulf %343, %344 : vector<16x1xf32>
    %346 = arith.mulf %341, %341 : vector<16x8xf32>
    %cst_246 = arith.constant dense<0.000000e+00> : vector<16xf32>
    %347 = vector.multi_reduction <add>, %346, %cst_246 [1] : vector<16x8xf32> to vector<16xf32>
    %348 = vector.shape_cast %347 : vector<16xf32> to vector<16x1xf32>
    %cst_247 = arith.constant 1.250000e-01 : f32
    %349 = vector.broadcast %cst_247 : f32 to vector<16x1xf32>
    %350 = arith.mulf %348, %349 : vector<16x1xf32>
    %351 = arith.mulf %345, %345 : vector<16x1xf32>
    %352 = arith.subf %350, %351 : vector<16x1xf32>
    %cst_248 = arith.constant 0.000000e+00 : f32
    %353 = vector.broadcast %cst_248 : f32 to vector<16x1xf32>
    %354 = arith.maximumf %352, %353 : vector<16x1xf32>
    %c0_249 = arith.constant 0 : index
    %c0_250 = arith.constant 0 : index
    %355 = vector.load %arg10[%c0_249, %c0_250] : memref<16x1xf32, #tpu.memory_space<vmem>>, vector<16x1xf32>
    %cst_251 = arith.constant 9.99999974E-6 : f32
    %356 = vector.broadcast %cst_251 : f32 to vector<16x1xf32>
    %357 = arith.addf %354, %356 : vector<16x1xf32>
    %358 = math.rsqrt %357 : vector<16x1xf32>
    %359 = arith.mulf %355, %358 : vector<16x1xf32>
    %c0_252 = arith.constant 0 : index
    %c0_253 = arith.constant 0 : index
    %360 = vector.load %arg11[%c0_252, %c0_253] : memref<16x1xf32, #tpu.memory_space<vmem>>, vector<16x1xf32>
    %361 = arith.mulf %345, %359 : vector<16x1xf32>
    %362 = arith.subf %360, %361 : vector<16x1xf32>
    %363 = vector.broadcast %359 : vector<16x1xf32> to vector<16x8xf32>
    %364 = arith.mulf %341, %363 : vector<16x8xf32>
    %365 = vector.broadcast %362 : vector<16x1xf32> to vector<16x8xf32>
    %366 = arith.addf %364, %365 : vector<16x8xf32>
    %c0_254 = arith.constant 0 : index
    %c0_255 = arith.constant 0 : index
    %367 = vector.load %arg12[%c0_254, %c0_255] : memref<16x8xf32, #tpu.memory_space<vmem>>, vector<16x8xf32>
    tpu.vector_store %arg12[%c0_254, %c0_255], %366 {strides = array<i32>} : memref<16x8xf32, #tpu.memory_space<vmem>>, vector<16x8xf32>,
    return
  }
  func.func @transform_0(%arg0: i32) -> (i32, i32) {
    %c0_i32 = arith.constant 0 : i32
    %c0_i32_0 = arith.constant 0 : i32
    %c0_i32_1 = arith.constant 0 : i32
    return %c0_i32, %c0_i32_0 : i32, i32
  }
  func.func @transform_1(%arg0: i32) -> (i32, i32) {
    %c0_i32 = arith.constant 0 : i32
    %c0_i32_0 = arith.constant 0 : i32
    %c0_i32_1 = arith.constant 0 : i32
    return %c0_i32, %c0_i32_0 : i32, i32
  }
  func.func @transform_2(%arg0: i32) -> (i32, i32, i32, i32) {
    %c0_i32 = arith.constant 0 : i32
    %c0_i32_0 = arith.constant 0 : i32
    %c0_i32_1 = arith.constant 0 : i32
    %c0_i32_2 = arith.constant 0 : i32
    %c0_i32_3 = arith.constant 0 : i32
    return %c0_i32, %c0_i32_0, %c0_i32_1, %c0_i32_2 : i32, i32, i32, i32
  }
  func.func @transform_3(%arg0: i32) -> (i32, i32) {
    %c0_i32 = arith.constant 0 : i32
    %c0_i32_0 = arith.constant 0 : i32
    %c0_i32_1 = arith.constant 0 : i32
    return %c0_i32, %c0_i32_0 : i32, i32
  }
  func.func @transform_4(%arg0: i32) -> (i32, i32) {
    %c0_i32 = arith.constant 0 : i32
    %c0_i32_0 = arith.constant 0 : i32
    %c0_i32_1 = arith.constant 0 : i32
    return %c0_i32, %c0_i32_0 : i32, i32
  }
  func.func @transform_5(%arg0: i32) -> (i32, i32) {
    %c0_i32 = arith.constant 0 : i32
    %c0_i32_0 = arith.constant 0 : i32
    %c0_i32_1 = arith.constant 0 : i32
    return %c0_i32, %c0_i32_0 : i32, i32
  }
  func.func @transform_6(%arg0: i32) -> (i32, i32) {
    %c0_i32 = arith.constant 0 : i32
    %c0_i32_0 = arith.constant 0 : i32
    %c0_i32_1 = arith.constant 0 : i32
    return %c0_i32, %c0_i32_0 : i32, i32
  }
  func.func @transform_7(%arg0: i32) -> (i32, i32, i32, i32) {
    %c0_i32 = arith.constant 0 : i32
    %c0_i32_0 = arith.constant 0 : i32
    %c0_i32_1 = arith.constant 0 : i32
    %c0_i32_2 = arith.constant 0 : i32
    %c0_i32_3 = arith.constant 0 : i32
    return %c0_i32, %c0_i32_0, %c0_i32_1, %c0_i32_2 : i32, i32, i32, i32
  }
  func.func @transform_8(%arg0: i32) -> (i32, i32) {
    %c0_i32 = arith.constant 0 : i32
    %c0_i32_0 = arith.constant 0 : i32
    %c0_i32_1 = arith.constant 0 : i32
    return %c0_i32, %c0_i32_0 : i32, i32
  }
  func.func @transform_9(%arg0: i32) -> (i32, i32) {
    %c0_i32 = arith.constant 0 : i32
    %c0_i32_0 = arith.constant 0 : i32
    %c0_i32_1 = arith.constant 0 : i32
    return %c0_i32, %c0_i32_0 : i32, i32
  }
  func.func @transform_10(%arg0: i32) -> (i32, i32) {
    %c0_i32 = arith.constant 0 : i32
    %c0_i32_0 = arith.constant 0 : i32
    %c0_i32_1 = arith.constant 0 : i32
    return %c0_i32, %c0_i32_0 : i32, i32
  }
  func.func @transform_11(%arg0: i32) -> (i32, i32) {
    %c0_i32 = arith.constant 0 : i32
    %c0_i32_0 = arith.constant 0 : i32
    %c0_i32_1 = arith.constant 0 : i32
    return %c0_i32, %c0_i32_0 : i32, i32
  }
}

</mosaic_0001>

<llo_original>
// kernel: tpu_custom_call.1
$region0: #{tpu_custom_call.1}
  #allocation0 [shape = 'u32[]', space=smem, size = 0x4, offset = 0x4, fixed_abs, tag = 'smem constant byte address 0x4 - core index']
  #allocation1 [shape = 'u32[144,128]{1,0:T(1,128)}', space=vmem, size = 0x12000, scoped, tag = 'internal scratch']
  #allocation2 [shape = 'f32[4,34]{1,0:T(4,128)}', space=vmem, size = 0x800, scoped, tag = 'scratch operand']
  #allocation3 [shape = 'f32[8,20]{1,0:T(8,128)}', space=vmem, size = 0x1000, scoped, tag = 'scratch operand']
  %s0 = inlined_call_operand.vmem [shape: f32[4,32], index: 0, kind: input, shape index: {}]
  %s1 = inlined_call_operand.vmem [shape: s32[1,32], index: 1, kind: input, shape index: {}]
  %s2 = inlined_call_operand.vmem [shape: f32[3,4,8,1], index: 2, kind: input, shape index: {}]
  %s3 = inlined_call_operand.vmem [shape: f32[8,1], index: 3, kind: input, shape index: {}]
  %s4 = inlined_call_operand.vmem [shape: f32[8,1], index: 4, kind: input, shape index: {}]
  %s5 = inlined_call_operand.vmem [shape: f32[8,1], index: 5, kind: input, shape index: {}]
  %s6 = inlined_call_operand.vmem [shape: s32[1,16], index: 6, kind: input, shape index: {}]
  %s7 = inlined_call_operand.vmem [shape: f32[3,8,16,1], index: 7, kind: input, shape index: {}]
  %s8 = inlined_call_operand.vmem [shape: f32[16,1], index: 8, kind: input, shape index: {}]
  %s9 = inlined_call_operand.vmem [shape: f32[16,1], index: 9, kind: input, shape index: {}]
  %s10 = inlined_call_operand.vmem [shape: f32[16,1], index: 10, kind: input, shape index: {}]
  %s11 = inlined_call_operand.vmem [shape: f32[16,8], index: 11, kind: output, shape index: {}]
  %s12 = sld [smem:[#allocation0]]
  $region54: #{tpu_custom_call.1} parent=0
    _
  %s14 = ssub.s32 1, %s12
  %s15 = scalar_select 0, %s14, %s12
  // Predicated region
  $region2: #{tpu_custom_call.1} parent=0 // pred_check
    _
  $region3: #{tpu_custom_call.1} parent=0 // pred_check_branch
    %17 = sbr.rel (0) target = $region5
  $region4: #{tpu_custom_call.1} parent=0 // pred_region
    _
  $region5: #{tpu_custom_call.1} parent=0 // pred_fallthru
    _
  // Predicated region
  $region6: #{tpu_custom_call.1} parent=0 // pred_check
    _
  $region7: #{tpu_custom_call.1} parent=0 // pred_check_branch
    %19 = sbr.rel (0) target = $region9
  $region8: #{tpu_custom_call.1} parent=0 // pred_region
    _
  $region9: #{tpu_custom_call.1} parent=0 // pred_fallthru
    _
  // Predicated region
  $region10: #{tpu_custom_call.1} parent=0 // pred_check
    _
  $region11: #{tpu_custom_call.1} parent=0 // pred_check_branch
    %21 = sbr.rel (0) target = $region13
  $region12: #{tpu_custom_call.1} parent=0 // pred_region
    _
  $region13: #{tpu_custom_call.1} parent=0 // pred_fallthru
    _
  // Predicated region
  $region14: #{tpu_custom_call.1} parent=0 // pred_check
    _
  $region15: #{tpu_custom_call.1} parent=0 // pred_check_branch
    %23 = sbr.rel (0) target = $region17
  $region16: #{tpu_custom_call.1} parent=0 // pred_region
    _
  $region17: #{tpu_custom_call.1} parent=0 // pred_fallthru
    _
  // Predicated region
  $region18: #{tpu_custom_call.1} parent=0 // pred_check
    _
  $region19: #{tpu_custom_call.1} parent=0 // pred_check_branch
    %25 = sbr.rel (0) target = $region21
  $region20: #{tpu_custom_call.1} parent=0 // pred_region
    _
  $region21: #{tpu_custom_call.1} parent=0 // pred_fallthru
    _
  // Predicated region
  $region22: #{tpu_custom_call.1} parent=0 // pred_check
    _
  $region23: #{tpu_custom_call.1} parent=0 // pred_check_branch
    %27 = sbr.rel (0) target = $region25
  $region24: #{tpu_custom_call.1} parent=0 // pred_region
    _
  $region25: #{tpu_custom_call.1} parent=0 // pred_fallthru
    _
  // Predicated region
  $region26: #{tpu_custom_call.1} parent=0 // pred_check
    _
  $region27: #{tpu_custom_call.1} parent=0 // pred_check_branch
    %29 = sbr.rel (0) target = $region29
  $region28: #{tpu_custom_call.1} parent=0 // pred_region
    _
  $region29: #{tpu_custom_call.1} parent=0 // pred_fallthru
    _
  // Predicated region
  $region30: #{tpu_custom_call.1} parent=0 // pred_check
    _
  $region31: #{tpu_custom_call.1} parent=0 // pred_check_branch
    %31 = sbr.rel (0) target = $region33
  $region32: #{tpu_custom_call.1} parent=0 // pred_region
    _
  $region33: #{tpu_custom_call.1} parent=0 // pred_fallthru
    _
  // Predicated region
  $region34: #{tpu_custom_call.1} parent=0 // pred_check
    _
  $region35: #{tpu_custom_call.1} parent=0 // pred_check_branch
    %33 = sbr.rel (0) target = $region37
  $region36: #{tpu_custom_call.1} parent=0 // pred_region
    _
  $region37: #{tpu_custom_call.1} parent=0 // pred_fallthru
    _
  // Predicated region
  $region38: #{tpu_custom_call.1} parent=0 // pred_check
    _
  $region39: #{tpu_custom_call.1} parent=0 // pred_check_branch
    %35 = sbr.rel (0) target = $region41
  $region40: #{tpu_custom_call.1} parent=0 // pred_region
    _
  $region41: #{tpu_custom_call.1} parent=0 // pred_fallthru
    _
  // Predicated region
  $region42: #{tpu_custom_call.1} parent=0 // pred_check
    _
  $region43: #{tpu_custom_call.1} parent=0 // pred_check_branch
    %37 = sbr.rel (0) target = $region45
  $region44: #{tpu_custom_call.1} parent=0 // pred_region
    _
  $region45: #{tpu_custom_call.1} parent=0 // pred_fallthru
    _
  %vm38 = vcmask 11264
  %39 = vst.msk [vmem:[#allocation2] sm:$0xf] %vm38, 0.0
  %v40 = vld [vmem:[%s0] sm:$0xf]
  %42 = vrot.lane.b32.xlu0 %v40, 2
  %v43 = vpop.permute.xlu0 %42
  %vm45 = vcmask 273424
  %46 = vst.msk [vmem:[#allocation2] sm:$0xf] %vm45, %v43
  %v47 = vld [vmem:[%s1] sm:$0x1]
  %vm48 = vcmp.ge.s32.totalorder %v47, 2
  %v49 = vsel %vm48, 1, 0
  %v50 = vcvt.s32.f32 %v49
  %v51 = vld [vmem:[#allocation2] sm:$0x1]
  %v52 = vmul.f32 %v51, %v50
  %v53 = vld [vmem:[%s2] sm:$0xff]
  %55 = vset.pattern.permute.xlu0 0
  %56 = vperm.xlu0 %55, %v53
  %v57 = vpop.permute.xlu0 %56
  %v59 = vlaneseq
  %v60 = vshrl.u32 %v59, 7
  %v61 = vsub.s32 0, %v60
  %v62 = vrot.slane %v52, %v61
  %v63 = vmul.f32 %v57, %v62
  %v64 = vld [vmem:[#allocation2 + $0x1] sm:$0x1]
  %v65 = vmul.f32 %v64, %v50
  %s66 = scalar_lea.vmem %s2, 8
  %v67 = vld [vmem:[%s66] sm:$0xff]
  %69 = vset.pattern.permute.xlu0 0
  %70 = vperm.xlu0 %69, %v67
  %v71 = vpop.permute.xlu0 %70
  %v73 = vlaneseq
  %v74 = vshrl.u32 %v73, 7
  %v75 = vsub.s32 0, %v74
  %v76 = vrot.slane %v65, %v75
  %v77 = vmul.f32 %v71, %v76
  %v78 = vadd.f32 %v63, %v77
  %v79 = vld [vmem:[#allocation2 + $0x2] sm:$0x1]
  %v80 = vmul.f32 %v79, %v50
  %s81 = scalar_lea.vmem %s2, 16
  %v82 = vld [vmem:[%s81] sm:$0xff]
  %84 = vset.pattern.permute.xlu0 0
  %85 = vperm.xlu0 %84, %v82
  %v86 = vpop.permute.xlu0 %85
  %v88 = vlaneseq
  %v89 = vshrl.u32 %v88, 7
  %v90 = vsub.s32 0, %v89
  %v91 = vrot.slane %v80, %v90
  %v92 = vmul.f32 %v86, %v91
  %v93 = vadd.f32 %v78, %v92
  %v94 = vld [vmem:[#allocation2 + $0x3] sm:$0x1]
  %v95 = vmul.f32 %v94, %v50
  %s96 = scalar_lea.vmem %s2, 24
  %v97 = vld [vmem:[%s96] sm:$0xff]
  %99 = vset.pattern.permute.xlu0 0
  %100 = vperm.xlu0 %99, %v97
  %v101 = vpop.permute.xlu0 %100
  %v103 = vlaneseq
  %v104 = vshrl.u32 %v103, 7
  %v105 = vsub.s32 0, %v104
  %v106 = vrot.slane %v95, %v105
  %v107 = vmul.f32 %v101, %v106
  %v108 = vadd.f32 %v93, %v107
  %vm109 = vcmp.ge.s32.totalorder %v47, 1
  %v110 = vsel %vm109, 1, 0
  %v111 = vcvt.s32.f32 %v110
  %v113 = vlaneseq
  %v114 = vshrl.u32 %v113, 7
  %v115 = vsub.s32 0, %v114
  %v116 = vrot.slane %v111, %v115
  %117 = vrot.lane.b32.xlu0 %v116, 1
  %v118 = vpop.permute.xlu0 %117
  %v120 = vmul.f32 %v51, %v118
  %s121 = scalar_lea.vmem %s2, 32
  %v122 = vld [vmem:[%s121] sm:$0xff]
  %124 = vset.pattern.permute.xlu0 0
  %125 = vperm.xlu0 %124, %v122
  %v126 = vpop.permute.xlu0 %125
  %v128 = vlaneseq
  %v129 = vshrl.u32 %v128, 7
  %v130 = vsub.s32 0, %v129
  %v131 = vrot.slane %v120, %v130
  %v132 = vmul.f32 %v126, %v131
  %134 = vrot.lane.b32.xlu0 %v132, 127
  %v135 = vpop.permute.xlu0 %134
  %v137 = vadd.f32 %v108, %v135
  %v138 = vmul.f32 %v64, %v118
  %s139 = scalar_lea.vmem %s2, 40
  %v140 = vld [vmem:[%s139] sm:$0xff]
  %142 = vset.pattern.permute.xlu0 0
  %143 = vperm.xlu0 %142, %v140
  %v144 = vpop.permute.xlu0 %143
  %v146 = vlaneseq
  %v147 = vshrl.u32 %v146, 7
  %v148 = vsub.s32 0, %v147
  %v149 = vrot.slane %v138, %v148
  %v150 = vmul.f32 %v144, %v149
  %152 = vrot.lane.b32.xlu0 %v150, 127
  %v153 = vpop.permute.xlu0 %152
  %v155 = vadd.f32 %v137, %v153
  %v156 = vmul.f32 %v79, %v118
  %s157 = scalar_lea.vmem %s2, 48
  %v158 = vld [vmem:[%s157] sm:$0xff]
  %160 = vset.pattern.permute.xlu0 0
  %161 = vperm.xlu0 %160, %v158
  %v162 = vpop.permute.xlu0 %161
  %v164 = vlaneseq
  %v165 = vshrl.u32 %v164, 7
  %v166 = vsub.s32 0, %v165
  %v167 = vrot.slane %v156, %v166
  %v168 = vmul.f32 %v162, %v167
  %170 = vrot.lane.b32.xlu0 %v168, 127
  %v171 = vpop.permute.xlu0 %170
  %v173 = vadd.f32 %v155, %v171
  %v174 = vmul.f32 %v94, %v118
  %s175 = scalar_lea.vmem %s2, 56
  %v176 = vld [vmem:[%s175] sm:$0xff]
  %178 = vset.pattern.permute.xlu0 0
  %179 = vperm.xlu0 %178, %v176
  %v180 = vpop.permute.xlu0 %179
  %v182 = vlaneseq
  %v183 = vshrl.u32 %v182, 7
  %v184 = vsub.s32 0, %v183
  %v185 = vrot.slane %v174, %v184
  %v186 = vmul.f32 %v180, %v185
  %188 = vrot.lane.b32.xlu0 %v186, 127
  %v189 = vpop.permute.xlu0 %188
  %v191 = vadd.f32 %v173, %v189
  %s192 = scalar_lea.vmem %s2, 64
  %v193 = vld [vmem:[%s192] sm:$0xff]
  %195 = vset.pattern.permute.xlu0 0
  %196 = vperm.xlu0 %195, %v193
  %v197 = vpop.permute.xlu0 %196
  %v199 = vlaneseq
  %v200 = vshrl.u32 %v199, 7
  %v201 = vsub.s32 0, %v200
  %v202 = vrot.slane %v51, %v201
  %v203 = vmul.f32 %v197, %v202
  %205 = vrot.lane.b32.xlu0 %v203, 126
  %v206 = vpop.permute.xlu0 %205
  %v208 = vadd.f32 %v191, %v206
  %s209 = scalar_lea.vmem %s2, 72
  %v210 = vld [vmem:[%s209] sm:$0xff]
  %212 = vset.pattern.permute.xlu0 0
  %213 = vperm.xlu0 %212, %v210
  %v214 = vpop.permute.xlu0 %213
  %v216 = vlaneseq
  %v217 = vshrl.u32 %v216, 7
  %v218 = vsub.s32 0, %v217
  %v219 = vrot.slane %v64, %v218
  %v220 = vmul.f32 %v214, %v219
  %222 = vrot.lane.b32.xlu0 %v220, 126
  %v223 = vpop.permute.xlu0 %222
  %v225 = vadd.f32 %v208, %v223
  %s226 = scalar_lea.vmem %s2, 80
  %v227 = vld [vmem:[%s226] sm:$0xff]
  %229 = vset.pattern.permute.xlu0 0
  %230 = vperm.xlu0 %229, %v227
  %v231 = vpop.permute.xlu0 %230
  %v233 = vlaneseq
  %v234 = vshrl.u32 %v233, 7
  %v235 = vsub.s32 0, %v234
  %v236 = vrot.slane %v79, %v235
  %v237 = vmul.f32 %v231, %v236
  %239 = vrot.lane.b32.xlu0 %v237, 126
  %v240 = vpop.permute.xlu0 %239
  %v242 = vadd.f32 %v225, %v240
  %s243 = scalar_lea.vmem %s2, 88
  %v244 = vld [vmem:[%s243] sm:$0xff]
  %246 = vset.pattern.permute.xlu0 0
  %247 = vperm.xlu0 %246, %v244
  %v248 = vpop.permute.xlu0 %247
  %v250 = vlaneseq
  %v251 = vshrl.u32 %v250, 7
  %v252 = vsub.s32 0, %v251
  %v253 = vrot.slane %v94, %v252
  %v254 = vmul.f32 %v248, %v253
  %256 = vrot.lane.b32.xlu0 %v254, 126
  %v257 = vpop.permute.xlu0 %256
  %v259 = vadd.f32 %v242, %v257
  %v260 = vld [vmem:[%s3] sm:$0xff]
  %262 = vset.pattern.permute.xlu0 0
  %263 = vperm.xlu0 %262, %v260
  %v264 = vpop.permute.xlu0 %263
  %v266 = vadd.f32 %v259, %v264
  %v267 = vmax.f32 %v266, 0.0
  %269 = vrot.lane.b32.xlu0 %v267, 126
  %v270 = vpop.permute.xlu0 %269
  %272 = vrot.lane.b32.xlu0 %v267, 124
  %v273 = vpop.permute.xlu0 %272
  %275 = vrot.lane.b32.xlu0 %v267, 122
  %v276 = vpop.permute.xlu0 %275
  %278 = vrot.lane.b32.xlu0 %v267, 120
  %v279 = vpop.permute.xlu0 %278
  %281 = vrot.lane.b32.xlu0 %v267, 118
  %v282 = vpop.permute.xlu0 %281
  %284 = vrot.lane.b32.xlu0 %v267, 116
  %v285 = vpop.permute.xlu0 %284
  %287 = vrot.lane.b32.xlu0 %v267, 114
  %v288 = vpop.permute.xlu0 %287
  %290 = vrot.lane.b32.xlu0 %v267, 112
  %v291 = vpop.permute.xlu0 %290
  %293 = vrot.lane.b32.xlu0 %v267, 110
  %v294 = vpop.permute.xlu0 %293
  %296 = vrot.lane.b32.xlu0 %v267, 108
  %v297 = vpop.permute.xlu0 %296
  %299 = vrot.lane.b32.xlu0 %v267, 106
  %v300 = vpop.permute.xlu0 %299
  %302 = vrot.lane.b32.xlu0 %v267, 104
  %v303 = vpop.permute.xlu0 %302
  %305 = vrot.lane.b32.xlu0 %v267, 102
  %v306 = vpop.permute.xlu0 %305
  %308 = vrot.lane.b32.xlu0 %v267, 100
  %v309 = vpop.permute.xlu0 %308
  %311 = vrot.lane.b32.xlu0 %v267, 98
  %v312 = vpop.permute.xlu0 %311
  %v314 = vcombine.low %v267, %v273
  %v315 = vcombine.high %v267, %v273
  %v317 = vunpack.c.l.s4 1983009808
  %v318 = vunpack.c.0.s8 %v317
  %v319 = vlaneseq
  %v320 = vshrl.u32 %v319, 7
  %v321 = vsub.s32 %v318, %v320
  %v322 = vrot.slane %v314, %v321
  %v324 = vunpack.c.l.s4 1983009808
  %v325 = vunpack.c.0.s8 %v324
  %v326 = vlaneseq
  %v327 = vshrl.u32 %v326, 7
  %v328 = vsub.s32 %v325, %v327
  %v329 = vrot.slane %v315, %v328
  %v330 = vcombine.low %v270, %v276
  %v331 = vcombine.high %v270, %v276
  %v333 = vunpack.c.l.s4 1983009808
  %v334 = vunpack.c.0.s8 %v333
  %v335 = vlaneseq
  %v336 = vshrl.u32 %v335, 7
  %v337 = vsub.s32 %v334, %v336
  %v338 = vrot.slane %v330, %v337
  %v340 = vunpack.c.l.s4 1983009808
  %v341 = vunpack.c.0.s8 %v340
  %v342 = vlaneseq
  %v343 = vshrl.u32 %v342, 7
  %v344 = vsub.s32 %v341, %v343
  %v345 = vrot.slane %v331, %v344
  %v346 = vcombine.low %v279, %v285
  %v347 = vcombine.high %v279, %v285
  %v349 = vunpack.c.l.s4 1983009808
  %v350 = vunpack.c.0.s8 %v349
  %v351 = vlaneseq
  %v352 = vshrl.u32 %v351, 7
  %v353 = vsub.s32 %v350, %v352
  %v354 = vrot.slane %v346, %v353
  %v356 = vunpack.c.l.s4 1983009808
  %v357 = vunpack.c.0.s8 %v356
  %v358 = vlaneseq
  %v359 = vshrl.u32 %v358, 7
  %v360 = vsub.s32 %v357, %v359
  %v361 = vrot.slane %v347, %v360
  %v362 = vcombine.low %v282, %v288
  %v363 = vcombine.high %v282, %v288
  %v365 = vunpack.c.l.s4 1983009808
  %v366 = vunpack.c.0.s8 %v365
  %v367 = vlaneseq
  %v368 = vshrl.u32 %v367, 7
  %v369 = vsub.s32 %v366, %v368
  %v370 = vrot.slane %v362, %v369
  %v372 = vunpack.c.l.s4 1983009808
  %v373 = vunpack.c.0.s8 %v372
  %v374 = vlaneseq
  %v375 = vshrl.u32 %v374, 7
  %v376 = vsub.s32 %v373, %v375
  %v377 = vrot.slane %v363, %v376
  %v378 = vcombine.low %v322, %v338
  %v379 = vcombine.high %v322, %v338
  %v381 = vunpack.c.l.s4 1934713408
  %v382 = vunpack.c.0.s8 %v381
  %v383 = vlaneseq
  %v384 = vshrl.u32 %v383, 7
  %v385 = vsub.s32 %v382, %v384
  %v386 = vrot.slane %v378, %v385
  %v388 = vunpack.c.l.s4 1934713408
  %v389 = vunpack.c.0.s8 %v388
  %v390 = vlaneseq
  %v391 = vshrl.u32 %v390, 7
  %v392 = vsub.s32 %v389, %v391
  %v393 = vrot.slane %v379, %v392
  %v394 = vcombine.low %v329, %v345
  %v395 = vcombine.high %v329, %v345
  %v397 = vunpack.c.l.s4 1934713408
  %v398 = vunpack.c.0.s8 %v397
  %v399 = vlaneseq
  %v400 = vshrl.u32 %v399, 7
  %v401 = vsub.s32 %v398, %v400
  %v402 = vrot.slane %v394, %v401
  %v404 = vunpack.c.l.s4 1934713408
  %v405 = vunpack.c.0.s8 %v404
  %v406 = vlaneseq
  %v407 = vshrl.u32 %v406, 7
  %v408 = vsub.s32 %v405, %v407
  %v409 = vrot.slane %v395, %v408
  %v410 = vcombine.low %v354, %v370
  %v411 = vcombine.high %v354, %v370
  %v413 = vunpack.c.l.s4 1934713408
  %v414 = vunpack.c.0.s8 %v413
  %v415 = vlaneseq
  %v416 = vshrl.u32 %v415, 7
  %v417 = vsub.s32 %v414, %v416
  %v418 = vrot.slane %v410, %v417
  %v420 = vunpack.c.l.s4 1934713408
  %v421 = vunpack.c.0.s8 %v420
  %v422 = vlaneseq
  %v423 = vshrl.u32 %v422, 7
  %v424 = vsub.s32 %v421, %v423
  %v425 = vrot.slane %v411, %v424
  %v426 = vcombine.low %v361, %v377
  %v427 = vcombine.high %v361, %v377
  %v429 = vunpack.c.l.s4 1934713408
  %v430 = vunpack.c.0.s8 %v429
  %v431 = vlaneseq
  %v432 = vshrl.u32 %v431, 7
  %v433 = vsub.s32 %v430, %v432
  %v434 = vrot.slane %v426, %v433
  %v436 = vunpack.c.l.s4 1934713408
  %v437 = vunpack.c.0.s8 %v436
  %v438 = vlaneseq
  %v439 = vshrl.u32 %v438, 7
  %v440 = vsub.s32 %v437, %v439
  %v441 = vrot.slane %v427, %v440
  %v442 = vcombine.low %v386, %v418
  %v443 = vcombine.high %v386, %v418
  %v444 = vcombine.low %v393, %v425
  %v445 = vcombine.high %v393, %v425
  %v446 = vcombine.low %v402, %v434
  %v447 = vcombine.high %v402, %v434
  %v448 = vcombine.low %v409, %v441
  %v449 = vcombine.high %v409, %v441
  %v450 = vcombine.low %v291, %v297
  %v451 = vcombine.high %v291, %v297
  %v453 = vunpack.c.l.s4 1983009808
  %v454 = vunpack.c.0.s8 %v453
  %v455 = vlaneseq
  %v456 = vshrl.u32 %v455, 7
  %v457 = vsub.s32 %v454, %v456
  %v458 = vrot.slane %v450, %v457
  %v460 = vunpack.c.l.s4 1983009808
  %v461 = vunpack.c.0.s8 %v460
  %v462 = vlaneseq
  %v463 = vshrl.u32 %v462, 7
  %v464 = vsub.s32 %v461, %v463
  %v465 = vrot.slane %v451, %v464
  %v466 = vcombine.low %v294, %v300
  %v467 = vcombine.high %v294, %v300
  %v469 = vunpack.c.l.s4 1983009808
  %v470 = vunpack.c.0.s8 %v469
  %v471 = vlaneseq
  %v472 = vshrl.u32 %v471, 7
  %v473 = vsub.s32 %v470, %v472
  %v474 = vrot.slane %v466, %v473
  %v476 = vunpack.c.l.s4 1983009808
  %v477 = vunpack.c.0.s8 %v476
  %v478 = vlaneseq
  %v479 = vshrl.u32 %v478, 7
  %v480 = vsub.s32 %v477, %v479
  %v481 = vrot.slane %v467, %v480
  %v482 = vcombine.low %v303, %v309
  %v483 = vcombine.high %v303, %v309
  %v485 = vunpack.c.l.s4 1983009808
  %v486 = vunpack.c.0.s8 %v485
  %v487 = vlaneseq
  %v488 = vshrl.u32 %v487, 7
  %v489 = vsub.s32 %v486, %v488
  %v490 = vrot.slane %v482, %v489
  %v492 = vunpack.c.l.s4 1983009808
  %v493 = vunpack.c.0.s8 %v492
  %v494 = vlaneseq
  %v495 = vshrl.u32 %v494, 7
  %v496 = vsub.s32 %v493, %v495
  %v497 = vrot.slane %v483, %v496
  %v498 = vcombine.low %v306, %v312
  %v499 = vcombine.high %v306, %v312
  %v501 = vunpack.c.l.s4 1983009808
  %v502 = vunpack.c.0.s8 %v501
  %v503 = vlaneseq
  %v504 = vshrl.u32 %v503, 7
  %v505 = vsub.s32 %v502, %v504
  %v506 = vrot.slane %v498, %v505
  %v508 = vunpack.c.l.s4 1983009808
  %v509 = vunpack.c.0.s8 %v508
  %v510 = vlaneseq
  %v511 = vshrl.u32 %v510, 7
  %v512 = vsub.s32 %v509, %v511
  %v513 = vrot.slane %v499, %v512
  %v514 = vcombine.low %v458, %v474
  %v515 = vcombine.high %v458, %v474
  %v517 = vunpack.c.l.s4 1934713408
  %v518 = vunpack.c.0.s8 %v517
  %v519 = vlaneseq
  %v520 = vshrl.u32 %v519, 7
  %v521 = vsub.s32 %v518, %v520
  %v522 = vrot.slane %v514, %v521
  %v524 = vunpack.c.l.s4 1934713408
  %v525 = vunpack.c.0.s8 %v524
  %v526 = vlaneseq
  %v527 = vshrl.u32 %v526, 7
  %v528 = vsub.s32 %v525, %v527
  %v529 = vrot.slane %v515, %v528
  %v530 = vcombine.low %v465, %v481
  %v531 = vcombine.high %v465, %v481
  %v533 = vunpack.c.l.s4 1934713408
  %v534 = vunpack.c.0.s8 %v533
  %v535 = vlaneseq
  %v536 = vshrl.u32 %v535, 7
  %v537 = vsub.s32 %v534, %v536
  %v538 = vrot.slane %v530, %v537
  %v540 = vunpack.c.l.s4 1934713408
  %v541 = vunpack.c.0.s8 %v540
  %v542 = vlaneseq
  %v543 = vshrl.u32 %v542, 7
  %v544 = vsub.s32 %v541, %v543
  %v545 = vrot.slane %v531, %v544
  %v546 = vcombine.low %v490, %v506
  %v547 = vcombine.high %v490, %v506
  %v549 = vunpack.c.l.s4 1934713408
  %v550 = vunpack.c.0.s8 %v549
  %v551 = vlaneseq
  %v552 = vshrl.u32 %v551, 7
  %v553 = vsub.s32 %v550, %v552
  %v554 = vrot.slane %v546, %v553
  %v556 = vunpack.c.l.s4 1934713408
  %v557 = vunpack.c.0.s8 %v556
  %v558 = vlaneseq
  %v559 = vshrl.u32 %v558, 7
  %v560 = vsub.s32 %v557, %v559
  %v561 = vrot.slane %v547, %v560
  %v562 = vcombine.low %v497, %v513
  %v563 = vcombine.high %v497, %v513
  %v565 = vunpack.c.l.s4 1934713408
  %v566 = vunpack.c.0.s8 %v565
  %v567 = vlaneseq
  %v568 = vshrl.u32 %v567, 7
  %v569 = vsub.s32 %v566, %v568
  %v570 = vrot.slane %v562, %v569
  %v572 = vunpack.c.l.s4 1934713408
  %v573 = vunpack.c.0.s8 %v572
  %v574 = vlaneseq
  %v575 = vshrl.u32 %v574, 7
  %v576 = vsub.s32 %v573, %v575
  %v577 = vrot.slane %v563, %v576
  %v578 = vcombine.low %v522, %v554
  %v579 = vcombine.high %v522, %v554
  %v580 = vcombine.low %v529, %v561
  %v581 = vcombine.high %v529, %v561
  %v582 = vcombine.low %v538, %v570
  %v583 = vcombine.high %v538, %v570
  %v584 = vcombine.low %v545, %v577
  %v585 = vcombine.high %v545, %v577
  %vm586 = vcmask 15360
  %v587 = vsel %vm586, %v442, 0.0
  %588 = vadd.xlane.f32.xlu0 %v587
  %v589 = vpop.xlane.xlu0 %588
  %v590 = vsel %vm586, %v578, 0.0
  %591 = vadd.xlane.f32.xlu0 %v590
  %v592 = vpop.xlane.xlu0 %591
  %v593 = vsel %vm586, %v443, 0.0
  %594 = vadd.xlane.f32.xlu0 %v593
  %v595 = vpop.xlane.xlu0 %594
  %v596 = vsel %vm586, %v579, 0.0
  %597 = vadd.xlane.f32.xlu0 %v596
  %v598 = vpop.xlane.xlu0 %597
  %v599 = vsel %vm586, %v444, 0.0
  %600 = vadd.xlane.f32.xlu0 %v599
  %v601 = vpop.xlane.xlu0 %600
  %v602 = vsel %vm586, %v580, 0.0
  %603 = vadd.xlane.f32.xlu0 %v602
  %v604 = vpop.xlane.xlu0 %603
  %v605 = vsel %vm586, %v445, 0.0
  %606 = vadd.xlane.f32.xlu0 %v605
  %v607 = vpop.xlane.xlu0 %606
  %v608 = vsel %vm586, %v581, 0.0
  %609 = vadd.xlane.f32.xlu0 %v608
  %v610 = vpop.xlane.xlu0 %609
  %v611 = vsel %vm586, %v446, 0.0
  %612 = vadd.xlane.f32.xlu0 %v611
  %v613 = vpop.xlane.xlu0 %612
  %v614 = vsel %vm586, %v582, 0.0
  %615 = vadd.xlane.f32.xlu0 %v614
  %v616 = vpop.xlane.xlu0 %615
  %v617 = vsel %vm586, %v447, 0.0
  %618 = vadd.xlane.f32.xlu0 %v617
  %v619 = vpop.xlane.xlu0 %618
  %v620 = vsel %vm586, %v583, 0.0
  %621 = vadd.xlane.f32.xlu0 %v620
  %v622 = vpop.xlane.xlu0 %621
  %v623 = vsel %vm586, %v448, 0.0
  %624 = vadd.xlane.f32.xlu0 %v623
  %v625 = vpop.xlane.xlu0 %624
  %v626 = vsel %vm586, %v584, 0.0
  %627 = vadd.xlane.f32.xlu0 %v626
  %v628 = vpop.xlane.xlu0 %627
  %v629 = vsel %vm586, %v449, 0.0
  %630 = vadd.xlane.f32.xlu0 %v629
  %v631 = vpop.xlane.xlu0 %630
  %v632 = vsel %vm586, %v585, 0.0
  %633 = vadd.xlane.f32.xlu0 %v632
  %v634 = vpop.xlane.xlu0 %633
  %v635 = vmul.f32 %v589, 0.5
  %v636 = vmul.f32 %v592, 0.5
  %v637 = vmul.f32 %v595, 0.5
  %v638 = vmul.f32 %v598, 0.5
  %v639 = vmul.f32 %v601, 0.5
  %v640 = vmul.f32 %v604, 0.5
  %v641 = vmul.f32 %v607, 0.5
  %v642 = vmul.f32 %v610, 0.5
  %v643 = vmul.f32 %v613, 0.5
  %v644 = vmul.f32 %v616, 0.5
  %v645 = vmul.f32 %v619, 0.5
  %v646 = vmul.f32 %v622, 0.5
  %v647 = vmul.f32 %v625, 0.5
  %v648 = vmul.f32 %v628, 0.5
  %v649 = vmul.f32 %v631, 0.5
  %v650 = vmul.f32 %v634, 0.5
  %v667 = vlaneseq
  %v668 = vand.u32 %v667, 127
  %v669 = vlaneseq
  %v670 = vshrl.u32 %v669, 7
  %v671 = vsub.s32 %v668, %v670
  %v672 = vrot.slane %v635, %v671
  %v673 = vadd.s32 %v668, 4294967288
  %v674 = vlaneseq
  %v675 = vshrl.u32 %v674, 7
  %v676 = vsub.s32 %v673, %v675
  %v677 = vrot.slane %v636, %v676
  %vm678 = vcmask 130112
  %v679 = vsel %vm678, %v677, %v672
  %v680 = vlaneseq
  %v681 = vshrl.u32 %v680, 7
  %v682 = vsub.s32 %v668, %v681
  %v683 = vrot.slane %v637, %v682
  %v684 = vlaneseq
  %v685 = vshrl.u32 %v684, 7
  %v686 = vsub.s32 %v673, %v685
  %v687 = vrot.slane %v638, %v686
  %v688 = vsel %vm678, %v687, %v683
  %v689 = vlaneseq
  %v690 = vshrl.u32 %v689, 7
  %v691 = vsub.s32 %v668, %v690
  %v692 = vrot.slane %v639, %v691
  %v693 = vlaneseq
  %v694 = vshrl.u32 %v693, 7
  %v695 = vsub.s32 %v673, %v694
  %v696 = vrot.slane %v640, %v695
  %v697 = vsel %vm678, %v696, %v692
  %v698 = vlaneseq
  %v699 = vshrl.u32 %v698, 7
  %v700 = vsub.s32 %v668, %v699
  %v701 = vrot.slane %v641, %v700
  %v702 = vlaneseq
  %v703 = vshrl.u32 %v702, 7
  %v704 = vsub.s32 %v673, %v703
  %v705 = vrot.slane %v642, %v704
  %v706 = vsel %vm678, %v705, %v701
  %v707 = vlaneseq
  %v708 = vshrl.u32 %v707, 7
  %v709 = vsub.s32 %v668, %v708
  %v710 = vrot.slane %v643, %v709
  %v711 = vlaneseq
  %v712 = vshrl.u32 %v711, 7
  %v713 = vsub.s32 %v673, %v712
  %v714 = vrot.slane %v644, %v713
  %v715 = vsel %vm678, %v714, %v710
  %v716 = vlaneseq
  %v717 = vshrl.u32 %v716, 7
  %v718 = vsub.s32 %v668, %v717
  %v719 = vrot.slane %v645, %v718
  %v720 = vlaneseq
  %v721 = vshrl.u32 %v720, 7
  %v722 = vsub.s32 %v673, %v721
  %v723 = vrot.slane %v646, %v722
  %v724 = vsel %vm678, %v723, %v719
  %v725 = vlaneseq
  %v726 = vshrl.u32 %v725, 7
  %v727 = vsub.s32 %v668, %v726
  %v728 = vrot.slane %v647, %v727
  %v729 = vlaneseq
  %v730 = vshrl.u32 %v729, 7
  %v731 = vsub.s32 %v673, %v730
  %v732 = vrot.slane %v648, %v731
  %v733 = vsel %vm678, %v732, %v728
  %v734 = vlaneseq
  %v735 = vshrl.u32 %v734, 7
  %v736 = vsub.s32 %v668, %v735
  %v737 = vrot.slane %v649, %v736
  %v738 = vlaneseq
  %v739 = vshrl.u32 %v738, 7
  %v740 = vsub.s32 %v673, %v739
  %v741 = vrot.slane %v650, %v740
  %v742 = vsel %vm678, %v741, %v737
  %vm743 = vcmask 1041409
  %v744 = vsel %vm743, %v688, %v679
  %vm745 = vcmask 1042434
  %v746 = vsel %vm745, %v697, %v744
  %vm747 = vcmask 1043459
  %v748 = vsel %vm747, %v706, %v746
  %vm749 = vcmask 1044484
  %v750 = vsel %vm749, %v715, %v748
  %vm751 = vcmask 1045509
  %v752 = vsel %vm751, %v724, %v750
  %vm753 = vcmask 1046534
  %v754 = vsel %vm753, %v733, %v752
  %vm755 = vcmask 1047559
  %v756 = vsel %vm755, %v742, %v754
  %vm758 = vcmask 130048
  %v759 = vsel %vm758, %v756, 0.0
  %760 = vadd.xlane.f32.xlu0 %v759
  %v761 = vpop.xlane.xlu0 %760
  %v762 = vmul.f32 %v761, 0.0625
  %v763 = vmul.f32 %v635, %v635
  %v764 = vmul.f32 %v636, %v636
  %v765 = vmul.f32 %v637, %v637
  %v766 = vmul.f32 %v638, %v638
  %v767 = vmul.f32 %v639, %v639
  %v768 = vmul.f32 %v640, %v640
  %v769 = vmul.f32 %v641, %v641
  %v770 = vmul.f32 %v642, %v642
  %v771 = vmul.f32 %v643, %v643
  %v772 = vmul.f32 %v644, %v644
  %v773 = vmul.f32 %v645, %v645
  %v774 = vmul.f32 %v646, %v646
  %v775 = vmul.f32 %v647, %v647
  %v776 = vmul.f32 %v648, %v648
  %v777 = vmul.f32 %v649, %v649
  %v778 = vmul.f32 %v650, %v650
  %v795 = vlaneseq
  %v796 = vshrl.u32 %v795, 7
  %v797 = vsub.s32 %v668, %v796
  %v798 = vrot.slane %v763, %v797
  %v799 = vlaneseq
  %v800 = vshrl.u32 %v799, 7
  %v801 = vsub.s32 %v673, %v800
  %v802 = vrot.slane %v764, %v801
  %v803 = vsel %vm678, %v802, %v798
  %v804 = vlaneseq
  %v805 = vshrl.u32 %v804, 7
  %v806 = vsub.s32 %v668, %v805
  %v807 = vrot.slane %v765, %v806
  %v808 = vlaneseq
  %v809 = vshrl.u32 %v808, 7
  %v810 = vsub.s32 %v673, %v809
  %v811 = vrot.slane %v766, %v810
  %v812 = vsel %vm678, %v811, %v807
  %v813 = vlaneseq
  %v814 = vshrl.u32 %v813, 7
  %v815 = vsub.s32 %v668, %v814
  %v816 = vrot.slane %v767, %v815
  %v817 = vlaneseq
  %v818 = vshrl.u32 %v817, 7
  %v819 = vsub.s32 %v673, %v818
  %v820 = vrot.slane %v768, %v819
  %v821 = vsel %vm678, %v820, %v816
  %v822 = vlaneseq
  %v823 = vshrl.u32 %v822, 7
  %v824 = vsub.s32 %v668, %v823
  %v825 = vrot.slane %v769, %v824
  %v826 = vlaneseq
  %v827 = vshrl.u32 %v826, 7
  %v828 = vsub.s32 %v673, %v827
  %v829 = vrot.slane %v770, %v828
  %v830 = vsel %vm678, %v829, %v825
  %v831 = vlaneseq
  %v832 = vshrl.u32 %v831, 7
  %v833 = vsub.s32 %v668, %v832
  %v834 = vrot.slane %v771, %v833
  %v835 = vlaneseq
  %v836 = vshrl.u32 %v835, 7
  %v837 = vsub.s32 %v673, %v836
  %v838 = vrot.slane %v772, %v837
  %v839 = vsel %vm678, %v838, %v834
  %v840 = vlaneseq
  %v841 = vshrl.u32 %v840, 7
  %v842 = vsub.s32 %v668, %v841
  %v843 = vrot.slane %v773, %v842
  %v844 = vlaneseq
  %v845 = vshrl.u32 %v844, 7
  %v846 = vsub.s32 %v673, %v845
  %v847 = vrot.slane %v774, %v846
  %v848 = vsel %vm678, %v847, %v843
  %v849 = vlaneseq
  %v850 = vshrl.u32 %v849, 7
  %v851 = vsub.s32 %v668, %v850
  %v852 = vrot.slane %v775, %v851
  %v853 = vlaneseq
  %v854 = vshrl.u32 %v853, 7
  %v855 = vsub.s32 %v673, %v854
  %v856 = vrot.slane %v776, %v855
  %v857 = vsel %vm678, %v856, %v852
  %v858 = vlaneseq
  %v859 = vshrl.u32 %v858, 7
  %v860 = vsub.s32 %v668, %v859
  %v861 = vrot.slane %v777, %v860
  %v862 = vlaneseq
  %v863 = vshrl.u32 %v862, 7
  %v864 = vsub.s32 %v673, %v863
  %v865 = vrot.slane %v778, %v864
  %v866 = vsel %vm678, %v865, %v861
  %v867 = vsel %vm743, %v812, %v803
  %v868 = vsel %vm745, %v821, %v867
  %v869 = vsel %vm747, %v830, %v868
  %v870 = vsel %vm749, %v839, %v869
  %v871 = vsel %vm751, %v848, %v870
  %v872 = vsel %vm753, %v857, %v871
  %v873 = vsel %vm755, %v866, %v872
  %v875 = vsel %vm758, %v873, 0.0
  %876 = vadd.xlane.f32.xlu0 %v875
  %v877 = vpop.xlane.xlu0 %876
  %v878 = vmul.f32 %v877, 0.0625
  %v879 = vmul.f32 %v762, %v762
  %v880 = vsub.f32 %v878, %v879
  %v881 = vmax.f32 %v880, 0.0
  %v882 = vld [vmem:[%s4] sm:$0xff]
  %v883 = vadd.f32 %v881, 1e-05
  %v884 = vrsqrt.pop %v883
  %v885 = vmul.f32 %v882, %v884
  %v886 = vld [vmem:[%s5] sm:$0xff]
  %v887 = vmul.f32 %v762, %v885
  %v888 = vsub.f32 %v886, %v887
  %890 = vset.pattern.permute.xlu0 0
  %891 = vperm.xlu0 %890, %v885
  %v892 = vpop.permute.xlu0 %891
  %v893 = vlaneseq
  %v894 = vshrl.u32 %v893, 7
  %v895 = vsub.s32 0, %v894
  %v896 = vrot.slane %v892, %v895
  %v897 = vlaneseq
  %v898 = vshrl.u32 %v897, 7
  %v899 = vsub.s32 1, %v898
  %v900 = vrot.slane %v892, %v899
  %v901 = vlaneseq
  %v902 = vshrl.u32 %v901, 7
  %v903 = vsub.s32 2, %v902
  %v904 = vrot.slane %v892, %v903
  %v905 = vlaneseq
  %v906 = vshrl.u32 %v905, 7
  %v907 = vsub.s32 3, %v906
  %v908 = vrot.slane %v892, %v907
  %v909 = vlaneseq
  %v910 = vshrl.u32 %v909, 7
  %v911 = vsub.s32 4, %v910
  %v912 = vrot.slane %v892, %v911
  %v913 = vlaneseq
  %v914 = vshrl.u32 %v913, 7
  %v915 = vsub.s32 5, %v914
  %v916 = vrot.slane %v892, %v915
  %v917 = vlaneseq
  %v918 = vshrl.u32 %v917, 7
  %v919 = vsub.s32 6, %v918
  %v920 = vrot.slane %v892, %v919
  %v921 = vlaneseq
  %v922 = vshrl.u32 %v921, 7
  %v923 = vsub.s32 7, %v922
  %v924 = vrot.slane %v892, %v923
  %v933 = vmul.f32 %v635, %v896
  %v934 = vmul.f32 %v636, %v896
  %v935 = vmul.f32 %v637, %v900
  %v936 = vmul.f32 %v638, %v900
  %v937 = vmul.f32 %v639, %v904
  %v938 = vmul.f32 %v640, %v904
  %v939 = vmul.f32 %v641, %v908
  %v940 = vmul.f32 %v642, %v908
  %v941 = vmul.f32 %v643, %v912
  %v942 = vmul.f32 %v644, %v912
  %v943 = vmul.f32 %v645, %v916
  %v944 = vmul.f32 %v646, %v916
  %v945 = vmul.f32 %v647, %v920
  %v946 = vmul.f32 %v648, %v920
  %v947 = vmul.f32 %v649, %v924
  %v948 = vmul.f32 %v650, %v924
  %950 = vset.pattern.permute.xlu0 0
  %951 = vperm.xlu0 %950, %v888
  %v952 = vpop.permute.xlu0 %951
  %v953 = vlaneseq
  %v954 = vshrl.u32 %v953, 7
  %v955 = vsub.s32 0, %v954
  %v956 = vrot.slane %v952, %v955
  %v957 = vlaneseq
  %v958 = vshrl.u32 %v957, 7
  %v959 = vsub.s32 1, %v958
  %v960 = vrot.slane %v952, %v959
  %v961 = vlaneseq
  %v962 = vshrl.u32 %v961, 7
  %v963 = vsub.s32 2, %v962
  %v964 = vrot.slane %v952, %v963
  %v965 = vlaneseq
  %v966 = vshrl.u32 %v965, 7
  %v967 = vsub.s32 3, %v966
  %v968 = vrot.slane %v952, %v967
  %v969 = vlaneseq
  %v970 = vshrl.u32 %v969, 7
  %v971 = vsub.s32 4, %v970
  %v972 = vrot.slane %v952, %v971
  %v973 = vlaneseq
  %v974 = vshrl.u32 %v973, 7
  %v975 = vsub.s32 5, %v974
  %v976 = vrot.slane %v952, %v975
  %v977 = vlaneseq
  %v978 = vshrl.u32 %v977, 7
  %v979 = vsub.s32 6, %v978
  %v980 = vrot.slane %v952, %v979
  %v981 = vlaneseq
  %v982 = vshrl.u32 %v981, 7
  %v983 = vsub.s32 7, %v982
  %v984 = vrot.slane %v952, %v983
  %v993 = vadd.f32 %v933, %v956
  %v994 = vadd.f32 %v934, %v956
  %v995 = vadd.f32 %v935, %v960
  %v996 = vadd.f32 %v936, %v960
  %v997 = vadd.f32 %v937, %v964
  %v998 = vadd.f32 %v938, %v964
  %v999 = vadd.f32 %v939, %v968
  %v1000 = vadd.f32 %v940, %v968
  %v1001 = vadd.f32 %v941, %v972
  %v1002 = vadd.f32 %v942, %v972
  %v1003 = vadd.f32 %v943, %v976
  %v1004 = vadd.f32 %v944, %v976
  %v1005 = vadd.f32 %v945, %v980
  %v1006 = vadd.f32 %v946, %v980
  %v1007 = vadd.f32 %v947, %v984
  %v1008 = vadd.f32 %v948, %v984
  %vm1009 = vcmask 31744
  %1010 = vst.msk [vmem:[#allocation3] sm:$0xff] %vm1009, 0.0
  %1027 = vset.pattern.permute.xlu0 0
  %1028 = vperm.xlu0 %1027, %v993
  %v1029 = vpop.permute.xlu0 %1028
  %1030 = vset.pattern.permute.xlu0 0
  %1031 = vperm.xlu0 %1030, %v994
  %v1032 = vpop.permute.xlu0 %1031
  %1033 = vset.pattern.permute.xlu0 0
  %1034 = vperm.xlu0 %1033, %v995
  %v1035 = vpop.permute.xlu0 %1034
  %1036 = vset.pattern.permute.xlu0 0
  %1037 = vperm.xlu0 %1036, %v996
  %v1038 = vpop.permute.xlu0 %1037
  %1039 = vset.pattern.permute.xlu0 0
  %1040 = vperm.xlu0 %1039, %v997
  %v1041 = vpop.permute.xlu0 %1040
  %1042 = vset.pattern.permute.xlu0 0
  %1043 = vperm.xlu0 %1042, %v998
  %v1044 = vpop.permute.xlu0 %1043
  %1045 = vset.pattern.permute.xlu0 0
  %1046 = vperm.xlu0 %1045, %v999
  %v1047 = vpop.permute.xlu0 %1046
  %1048 = vset.pattern.permute.xlu0 0
  %1049 = vperm.xlu0 %1048, %v1000
  %v1050 = vpop.permute.xlu0 %1049
  %1051 = vset.pattern.permute.xlu0 0
  %1052 = vperm.xlu0 %1051, %v1001
  %v1053 = vpop.permute.xlu0 %1052
  %1054 = vset.pattern.permute.xlu0 0
  %1055 = vperm.xlu0 %1054, %v1002
  %v1056 = vpop.permute.xlu0 %1055
  %1057 = vset.pattern.permute.xlu0 0
  %1058 = vperm.xlu0 %1057, %v1003
  %v1059 = vpop.permute.xlu0 %1058
  %1060 = vset.pattern.permute.xlu0 0
  %1061 = vperm.xlu0 %1060, %v1004
  %v1062 = vpop.permute.xlu0 %1061
  %1063 = vset.pattern.permute.xlu0 0
  %1064 = vperm.xlu0 %1063, %v1005
  %v1065 = vpop.permute.xlu0 %1064
  %1066 = vset.pattern.permute.xlu0 0
  %1067 = vperm.xlu0 %1066, %v1006
  %v1068 = vpop.permute.xlu0 %1067
  %1069 = vset.pattern.permute.xlu0 0
  %1070 = vperm.xlu0 %1069, %v1007
  %v1071 = vpop.permute.xlu0 %1070
  %1072 = vset.pattern.permute.xlu0 0
  %1073 = vperm.xlu0 %1072, %v1008
  %v1074 = vpop.permute.xlu0 %1073
  %v1075 = vadd.s32 %v668, 4294967292
  %v1076 = vlaneseq
  %v1077 = vshrl.u32 %v1076, 7
  %v1078 = vsub.s32 %v1075, %v1077
  %v1079 = vrot.slane %v1029, %v1078
  %v1080 = vadd.s32 %v668, 4294967284
  %v1081 = vlaneseq
  %v1082 = vshrl.u32 %v1081, 7
  %v1083 = vsub.s32 %v1080, %v1082
  %v1084 = vrot.slane %v1032, %v1083
  %vm1085 = vcmask 162912
  %v1086 = vsel %vm1085, %v1084, %v1079
  %v1087 = vlaneseq
  %v1088 = vshrl.u32 %v1087, 7
  %v1089 = vsub.s32 %v1075, %v1088
  %v1090 = vrot.slane %v1035, %v1089
  %v1091 = vlaneseq
  %v1092 = vshrl.u32 %v1091, 7
  %v1093 = vsub.s32 %v1080, %v1092
  %v1094 = vrot.slane %v1038, %v1093
  %v1095 = vsel %vm1085, %v1094, %v1090
  %v1096 = vlaneseq
  %v1097 = vshrl.u32 %v1096, 7
  %v1098 = vsub.s32 %v1075, %v1097
  %v1099 = vrot.slane %v1041, %v1098
  %v1100 = vlaneseq
  %v1101 = vshrl.u32 %v1100, 7
  %v1102 = vsub.s32 %v1080, %v1101
  %v1103 = vrot.slane %v1044, %v1102
  %v1104 = vsel %vm1085, %v1103, %v1099
  %v1105 = vlaneseq
  %v1106 = vshrl.u32 %v1105, 7
  %v1107 = vsub.s32 %v1075, %v1106
  %v1108 = vrot.slane %v1047, %v1107
  %v1109 = vlaneseq
  %v1110 = vshrl.u32 %v1109, 7
  %v1111 = vsub.s32 %v1080, %v1110
  %v1112 = vrot.slane %v1050, %v1111
  %v1113 = vsel %vm1085, %v1112, %v1108
  %v1114 = vlaneseq
  %v1115 = vshrl.u32 %v1114, 7
  %v1116 = vsub.s32 %v1075, %v1115
  %v1117 = vrot.slane %v1053, %v1116
  %v1118 = vlaneseq
  %v1119 = vshrl.u32 %v1118, 7
  %v1120 = vsub.s32 %v1080, %v1119
  %v1121 = vrot.slane %v1056, %v1120
  %v1122 = vsel %vm1085, %v1121, %v1117
  %v1123 = vlaneseq
  %v1124 = vshrl.u32 %v1123, 7
  %v1125 = vsub.s32 %v1075, %v1124
  %v1126 = vrot.slane %v1059, %v1125
  %v1127 = vlaneseq
  %v1128 = vshrl.u32 %v1127, 7
  %v1129 = vsub.s32 %v1080, %v1128
  %v1130 = vrot.slane %v1062, %v1129
  %v1131 = vsel %vm1085, %v1130, %v1126
  %v1132 = vlaneseq
  %v1133 = vshrl.u32 %v1132, 7
  %v1134 = vsub.s32 %v1075, %v1133
  %v1135 = vrot.slane %v1065, %v1134
  %v1136 = vlaneseq
  %v1137 = vshrl.u32 %v1136, 7
  %v1138 = vsub.s32 %v1080, %v1137
  %v1139 = vrot.slane %v1068, %v1138
  %v1140 = vsel %vm1085, %v1139, %v1135
  %v1141 = vlaneseq
  %v1142 = vshrl.u32 %v1141, 7
  %v1143 = vsub.s32 %v1075, %v1142
  %v1144 = vrot.slane %v1071, %v1143
  %v1145 = vlaneseq
  %v1146 = vshrl.u32 %v1145, 7
  %v1147 = vsub.s32 %v1080, %v1146
  %v1148 = vrot.slane %v1074, %v1147
  %v1149 = vsel %vm1085, %v1148, %v1144
  %v1150 = vsel %vm743, %v1095, %v1086
  %v1151 = vsel %vm745, %v1104, %v1150
  %v1152 = vsel %vm747, %v1113, %v1151
  %v1153 = vsel %vm749, %v1122, %v1152
  %v1154 = vsel %vm751, %v1131, %v1153
  %v1155 = vsel %vm753, %v1140, %v1154
  %v1156 = vsel %vm755, %v1149, %v1155
  %vm1158 = vcmask 162848
  %1159 = vst.msk [vmem:[#allocation3] sm:$0xff] %vm1158, %v1156
  %v1160 = vld [vmem:[%s6] sm:$0x1]
  %vm1161 = vcmp.ge.s32.totalorder %v1160, 4
  %v1162 = vsel %vm1161, 1, 0
  %v1163 = vcvt.s32.f32 %v1162
  %v1164 = vld [vmem:[#allocation3] sm:$0x1]
  %v1165 = vmul.f32 %v1164, %v1163
  %v1166 = vld [vmem:[%s7] sm:$0xff]
  %v1167 = vld [vmem:[%s7 + $0x8] sm:$0xff]
  %1169 = vset.pattern.permute.xlu0 0
  %1170 = vperm.xlu0 %1169, %v1166
  %v1171 = vpop.permute.xlu0 %1170
  %1174 = vset.pattern.permute.xlu0 0
  %1175 = vperm.xlu0 %1174, %v1167
  %v1176 = vpop.permute.xlu0 %1175
  %v1178 = vlaneseq
  %v1179 = vshrl.u32 %v1178, 7
  %v1180 = vsub.s32 0, %v1179
  %v1181 = vrot.slane %v1165, %v1180
  %v1182 = vmul.f32 %v1171, %v1181
  %v1183 = vmul.f32 %v1176, %v1181
  %v1184 = vld [vmem:[#allocation3 + $0x1] sm:$0x1]
  %v1185 = vmul.f32 %v1184, %v1163
  %s1186 = scalar_lea.vmem %s7, 16
  %v1187 = vld [vmem:[%s1186] sm:$0xff]
  %v1188 = vld [vmem:[%s1186 + $0x8] sm:$0xff]
  %1190 = vset.pattern.permute.xlu0 0
  %1191 = vperm.xlu0 %1190, %v1187
  %v1192 = vpop.permute.xlu0 %1191
  %1195 = vset.pattern.permute.xlu0 0
  %1196 = vperm.xlu0 %1195, %v1188
  %v1197 = vpop.permute.xlu0 %1196
  %v1199 = vlaneseq
  %v1200 = vshrl.u32 %v1199, 7
  %v1201 = vsub.s32 0, %v1200
  %v1202 = vrot.slane %v1185, %v1201
  %v1203 = vmul.f32 %v1192, %v1202
  %v1204 = vmul.f32 %v1197, %v1202
  %v1205 = vadd.f32 %v1182, %v1203
  %v1206 = vadd.f32 %v1183, %v1204
  %v1207 = vld [vmem:[#allocation3 + $0x2] sm:$0x1]
  %v1208 = vmul.f32 %v1207, %v1163
  %s1209 = scalar_lea.vmem %s7, 32
  %v1210 = vld [vmem:[%s1209] sm:$0xff]
  %v1211 = vld [vmem:[%s1209 + $0x8] sm:$0xff]
  %1213 = vset.pattern.permute.xlu0 0
  %1214 = vperm.xlu0 %1213, %v1210
  %v1215 = vpop.permute.xlu0 %1214
  %1218 = vset.pattern.permute.xlu0 0
  %1219 = vperm.xlu0 %1218, %v1211
  %v1220 = vpop.permute.xlu0 %1219
  %v1222 = vlaneseq
  %v1223 = vshrl.u32 %v1222, 7
  %v1224 = vsub.s32 0, %v1223
  %v1225 = vrot.slane %v1208, %v1224
  %v1226 = vmul.f32 %v1215, %v1225
  %v1227 = vmul.f32 %v1220, %v1225
  %v1228 = vadd.f32 %v1205, %v1226
  %v1229 = vadd.f32 %v1206, %v1227
  %v1230 = vld [vmem:[#allocation3 + $0x3] sm:$0x1]
  %v1231 = vmul.f32 %v1230, %v1163
  %s1232 = scalar_lea.vmem %s7, 48
  %v1233 = vld [vmem:[%s1232] sm:$0xff]
  %v1234 = vld [vmem:[%s1232 + $0x8] sm:$0xff]
  %1236 = vset.pattern.permute.xlu0 0
  %1237 = vperm.xlu0 %1236, %v1233
  %v1238 = vpop.permute.xlu0 %1237
  %1241 = vset.pattern.permute.xlu0 0
  %1242 = vperm.xlu0 %1241, %v1234
  %v1243 = vpop.permute.xlu0 %1242
  %v1245 = vlaneseq
  %v1246 = vshrl.u32 %v1245, 7
  %v1247 = vsub.s32 0, %v1246
  %v1248 = vrot.slane %v1231, %v1247
  %v1249 = vmul.f32 %v1238, %v1248
  %v1250 = vmul.f32 %v1243, %v1248
  %v1251 = vadd.f32 %v1228, %v1249
  %v1252 = vadd.f32 %v1229, %v1250
  %v1253 = vld [vmem:[#allocation3 + $0x4] sm:$0x1]
  %v1254 = vmul.f32 %v1253, %v1163
  %s1255 = scalar_lea.vmem %s7, 64
  %v1256 = vld [vmem:[%s1255] sm:$0xff]
  %v1257 = vld [vmem:[%s1255 + $0x8] sm:$0xff]
  %1259 = vset.pattern.permute.xlu0 0
  %1260 = vperm.xlu0 %1259, %v1256
  %v1261 = vpop.permute.xlu0 %1260
  %1264 = vset.pattern.permute.xlu0 0
  %1265 = vperm.xlu0 %1264, %v1257
  %v1266 = vpop.permute.xlu0 %1265
  %v1268 = vlaneseq
  %v1269 = vshrl.u32 %v1268, 7
  %v1270 = vsub.s32 0, %v1269
  %v1271 = vrot.slane %v1254, %v1270
  %v1272 = vmul.f32 %v1261, %v1271
  %v1273 = vmul.f32 %v1266, %v1271
  %v1274 = vadd.f32 %v1251, %v1272
  %v1275 = vadd.f32 %v1252, %v1273
  %v1276 = vld [vmem:[#allocation3 + $0x5] sm:$0x1]
  %v1277 = vmul.f32 %v1276, %v1163
  %s1278 = scalar_lea.vmem %s7, 80
  %v1279 = vld [vmem:[%s1278] sm:$0xff]
  %v1280 = vld [vmem:[%s1278 + $0x8] sm:$0xff]
  %1282 = vset.pattern.permute.xlu0 0
  %1283 = vperm.xlu0 %1282, %v1279
  %v1284 = vpop.permute.xlu0 %1283
  %1287 = vset.pattern.permute.xlu0 0
  %1288 = vperm.xlu0 %1287, %v1280
  %v1289 = vpop.permute.xlu0 %1288
  %v1291 = vlaneseq
  %v1292 = vshrl.u32 %v1291, 7
  %v1293 = vsub.s32 0, %v1292
  %v1294 = vrot.slane %v1277, %v1293
  %v1295 = vmul.f32 %v1284, %v1294
  %v1296 = vmul.f32 %v1289, %v1294
  %v1297 = vadd.f32 %v1274, %v1295
  %v1298 = vadd.f32 %v1275, %v1296
  %v1299 = vld [vmem:[#allocation3 + $0x6] sm:$0x1]
  %v1300 = vmul.f32 %v1299, %v1163
  %s1301 = scalar_lea.vmem %s7, 96
  %v1302 = vld [vmem:[%s1301] sm:$0xff]
  %v1303 = vld [vmem:[%s1301 + $0x8] sm:$0xff]
  %1305 = vset.pattern.permute.xlu0 0
  %1306 = vperm.xlu0 %1305, %v1302
  %v1307 = vpop.permute.xlu0 %1306
  %1310 = vset.pattern.permute.xlu0 0
  %1311 = vperm.xlu0 %1310, %v1303
  %v1312 = vpop.permute.xlu0 %1311
  %v1314 = vlaneseq
  %v1315 = vshrl.u32 %v1314, 7
  %v1316 = vsub.s32 0, %v1315
  %v1317 = vrot.slane %v1300, %v1316
  %v1318 = vmul.f32 %v1307, %v1317
  %v1319 = vmul.f32 %v1312, %v1317
  %v1320 = vadd.f32 %v1297, %v1318
  %v1321 = vadd.f32 %v1298, %v1319
  %v1322 = vld [vmem:[#allocation3 + $0x7] sm:$0x1]
  %v1323 = vmul.f32 %v1322, %v1163
  %s1324 = scalar_lea.vmem %s7, 112
  %v1325 = vld [vmem:[%s1324] sm:$0xff]
  %v1326 = vld [vmem:[%s1324 + $0x8] sm:$0xff]
  %1328 = vset.pattern.permute.xlu0 0
  %1329 = vperm.xlu0 %1328, %v1325
  %v1330 = vpop.permute.xlu0 %1329
  %1333 = vset.pattern.permute.xlu0 0
  %1334 = vperm.xlu0 %1333, %v1326
  %v1335 = vpop.permute.xlu0 %1334
  %v1337 = vlaneseq
  %v1338 = vshrl.u32 %v1337, 7
  %v1339 = vsub.s32 0, %v1338
  %v1340 = vrot.slane %v1323, %v1339
  %v1341 = vmul.f32 %v1330, %v1340
  %v1342 = vmul.f32 %v1335, %v1340
  %v1343 = vadd.f32 %v1320, %v1341
  %v1344 = vadd.f32 %v1321, %v1342
  %vm1345 = vcmp.ge.s32.totalorder %v1160, 2
  %v1346 = vsel %vm1345, 1, 0
  %v1347 = vcvt.s32.f32 %v1346
  %v1349 = vlaneseq
  %v1350 = vshrl.u32 %v1349, 7
  %v1351 = vsub.s32 0, %v1350
  %v1352 = vrot.slane %v1347, %v1351
  %1353 = vrot.lane.b32.xlu0 %v1352, 2
  %v1354 = vpop.permute.xlu0 %1353
  %v1356 = vmul.f32 %v1164, %v1354
  %s1357 = scalar_lea.vmem %s7, 128
  %v1358 = vld [vmem:[%s1357] sm:$0xff]
  %v1359 = vld [vmem:[%s1357 + $0x8] sm:$0xff]
  %1361 = vset.pattern.permute.xlu0 0
  %1362 = vperm.xlu0 %1361, %v1358
  %v1363 = vpop.permute.xlu0 %1362
  %1366 = vset.pattern.permute.xlu0 0
  %1367 = vperm.xlu0 %1366, %v1359
  %v1368 = vpop.permute.xlu0 %1367
  %v1370 = vlaneseq
  %v1371 = vshrl.u32 %v1370, 7
  %v1372 = vsub.s32 0, %v1371
  %v1373 = vrot.slane %v1356, %v1372
  %v1374 = vmul.f32 %v1363, %v1373
  %v1375 = vmul.f32 %v1368, %v1373
  %1378 = vrot.lane.b32.xlu0 %v1374, 126
  %v1379 = vpop.permute.xlu0 %1378
  %1380 = vrot.lane.b32.xlu0 %v1375, 126
  %v1381 = vpop.permute.xlu0 %1380
  %v1384 = vadd.f32 %v1343, %v1379
  %v1385 = vadd.f32 %v1344, %v1381
  %v1386 = vmul.f32 %v1184, %v1354
  %s1387 = scalar_lea.vmem %s7, 144
  %v1388 = vld [vmem:[%s1387] sm:$0xff]
  %v1389 = vld [vmem:[%s1387 + $0x8] sm:$0xff]
  %1391 = vset.pattern.permute.xlu0 0
  %1392 = vperm.xlu0 %1391, %v1388
  %v1393 = vpop.permute.xlu0 %1392
  %1396 = vset.pattern.permute.xlu0 0
  %1397 = vperm.xlu0 %1396, %v1389
  %v1398 = vpop.permute.xlu0 %1397
  %v1400 = vlaneseq
  %v1401 = vshrl.u32 %v1400, 7
  %v1402 = vsub.s32 0, %v1401
  %v1403 = vrot.slane %v1386, %v1402
  %v1404 = vmul.f32 %v1393, %v1403
  %v1405 = vmul.f32 %v1398, %v1403
  %1408 = vrot.lane.b32.xlu0 %v1404, 126
  %v1409 = vpop.permute.xlu0 %1408
  %1410 = vrot.lane.b32.xlu0 %v1405, 126
  %v1411 = vpop.permute.xlu0 %1410
  %v1414 = vadd.f32 %v1384, %v1409
  %v1415 = vadd.f32 %v1385, %v1411
  %v1416 = vmul.f32 %v1207, %v1354
  %s1417 = scalar_lea.vmem %s7, 160
  %v1418 = vld [vmem:[%s1417] sm:$0xff]
  %v1419 = vld [vmem:[%s1417 + $0x8] sm:$0xff]
  %1421 = vset.pattern.permute.xlu0 0
  %1422 = vperm.xlu0 %1421, %v1418
  %v1423 = vpop.permute.xlu0 %1422
  %1426 = vset.pattern.permute.xlu0 0
  %1427 = vperm.xlu0 %1426, %v1419
  %v1428 = vpop.permute.xlu0 %1427
  %v1430 = vlaneseq
  %v1431 = vshrl.u32 %v1430, 7
  %v1432 = vsub.s32 0, %v1431
  %v1433 = vrot.slane %v1416, %v1432
  %v1434 = vmul.f32 %v1423, %v1433
  %v1435 = vmul.f32 %v1428, %v1433
  %1438 = vrot.lane.b32.xlu0 %v1434, 126
  %v1439 = vpop.permute.xlu0 %1438
  %1440 = vrot.lane.b32.xlu0 %v1435, 126
  %v1441 = vpop.permute.xlu0 %1440
  %v1444 = vadd.f32 %v1414, %v1439
  %v1445 = vadd.f32 %v1415, %v1441
  %v1446 = vmul.f32 %v1230, %v1354
  %s1447 = scalar_lea.vmem %s7, 176
  %v1448 = vld [vmem:[%s1447] sm:$0xff]
  %v1449 = vld [vmem:[%s1447 + $0x8] sm:$0xff]
  %1451 = vset.pattern.permute.xlu0 0
  %1452 = vperm.xlu0 %1451, %v1448
  %v1453 = vpop.permute.xlu0 %1452
  %1456 = vset.pattern.permute.xlu0 0
  %1457 = vperm.xlu0 %1456, %v1449
  %v1458 = vpop.permute.xlu0 %1457
  %v1460 = vlaneseq
  %v1461 = vshrl.u32 %v1460, 7
  %v1462 = vsub.s32 0, %v1461
  %v1463 = vrot.slane %v1446, %v1462
  %v1464 = vmul.f32 %v1453, %v1463
  %v1465 = vmul.f32 %v1458, %v1463
  %1468 = vrot.lane.b32.xlu0 %v1464, 126
  %v1469 = vpop.permute.xlu0 %1468
  %1470 = vrot.lane.b32.xlu0 %v1465, 126
  %v1471 = vpop.permute.xlu0 %1470
  %v1474 = vadd.f32 %v1444, %v1469
  %v1475 = vadd.f32 %v1445, %v1471
  %v1476 = vmul.f32 %v1253, %v1354
  %s1477 = scalar_lea.vmem %s7, 192
  %v1478 = vld [vmem:[%s1477] sm:$0xff]
  %v1479 = vld [vmem:[%s1477 + $0x8] sm:$0xff]
  %1481 = vset.pattern.permute.xlu0 0
  %1482 = vperm.xlu0 %1481, %v1478
  %v1483 = vpop.permute.xlu0 %1482
  %1486 = vset.pattern.permute.xlu0 0
  %1487 = vperm.xlu0 %1486, %v1479
  %v1488 = vpop.permute.xlu0 %1487
  %v1490 = vlaneseq
  %v1491 = vshrl.u32 %v1490, 7
  %v1492 = vsub.s32 0, %v1491
  %v1493 = vrot.slane %v1476, %v1492
  %v1494 = vmul.f32 %v1483, %v1493
  %v1495 = vmul.f32 %v1488, %v1493
  %1498 = vrot.lane.b32.xlu0 %v1494, 126
  %v1499 = vpop.permute.xlu0 %1498
  %1500 = vrot.lane.b32.xlu0 %v1495, 126
  %v1501 = vpop.permute.xlu0 %1500
  %v1504 = vadd.f32 %v1474, %v1499
  %v1505 = vadd.f32 %v1475, %v1501
  %v1506 = vmul.f32 %v1276, %v1354
  %s1507 = scalar_lea.vmem %s7, 208
  %v1508 = vld [vmem:[%s1507] sm:$0xff]
  %v1509 = vld [vmem:[%s1507 + $0x8] sm:$0xff]
  %1511 = vset.pattern.permute.xlu0 0
  %1512 = vperm.xlu0 %1511, %v1508
  %v1513 = vpop.permute.xlu0 %1512
  %1516 = vset.pattern.permute.xlu0 0
  %1517 = vperm.xlu0 %1516, %v1509
  %v1518 = vpop.permute.xlu0 %1517
  %v1520 = vlaneseq
  %v1521 = vshrl.u32 %v1520, 7
  %v1522 = vsub.s32 0, %v1521
  %v1523 = vrot.slane %v1506, %v1522
  %v1524 = vmul.f32 %v1513, %v1523
  %v1525 = vmul.f32 %v1518, %v1523
  %1528 = vrot.lane.b32.xlu0 %v1524, 126
  %v1529 = vpop.permute.xlu0 %1528
  %1530 = vrot.lane.b32.xlu0 %v1525, 126
  %v1531 = vpop.permute.xlu0 %1530
  %v1534 = vadd.f32 %v1504, %v1529
  %v1535 = vadd.f32 %v1505, %v1531
  %v1536 = vmul.f32 %v1299, %v1354
  %s1537 = scalar_lea.vmem %s7, 224
  %v1538 = vld [vmem:[%s1537] sm:$0xff]
  %v1539 = vld [vmem:[%s1537 + $0x8] sm:$0xff]
  %1541 = vset.pattern.permute.xlu0 0
  %1542 = vperm.xlu0 %1541, %v1538
  %v1543 = vpop.permute.xlu0 %1542
  %1546 = vset.pattern.permute.xlu0 0
  %1547 = vperm.xlu0 %1546, %v1539
  %v1548 = vpop.permute.xlu0 %1547
  %v1550 = vlaneseq
  %v1551 = vshrl.u32 %v1550, 7
  %v1552 = vsub.s32 0, %v1551
  %v1553 = vrot.slane %v1536, %v1552
  %v1554 = vmul.f32 %v1543, %v1553
  %v1555 = vmul.f32 %v1548, %v1553
  %1558 = vrot.lane.b32.xlu0 %v1554, 126
  %v1559 = vpop.permute.xlu0 %1558
  %1560 = vrot.lane.b32.xlu0 %v1555, 126
  %v1561 = vpop.permute.xlu0 %1560
  %v1564 = vadd.f32 %v1534, %v1559
  %v1565 = vadd.f32 %v1535, %v1561
  %v1566 = vmul.f32 %v1322, %v1354
  %s1567 = scalar_lea.vmem %s7, 240
  %v1568 = vld [vmem:[%s1567] sm:$0xff]
  %v1569 = vld [vmem:[%s1567 + $0x8] sm:$0xff]
  %1571 = vset.pattern.permute.xlu0 0
  %1572 = vperm.xlu0 %1571, %v1568
  %v1573 = vpop.permute.xlu0 %1572
  %1576 = vset.pattern.permute.xlu0 0
  %1577 = vperm.xlu0 %1576, %v1569
  %v1578 = vpop.permute.xlu0 %1577
  %v1580 = vlaneseq
  %v1581 = vshrl.u32 %v1580, 7
  %v1582 = vsub.s32 0, %v1581
  %v1583 = vrot.slane %v1566, %v1582
  %v1584 = vmul.f32 %v1573, %v1583
  %v1585 = vmul.f32 %v1578, %v1583
  %1588 = vrot.lane.b32.xlu0 %v1584, 126
  %v1589 = vpop.permute.xlu0 %1588
  %1590 = vrot.lane.b32.xlu0 %v1585, 126
  %v1591 = vpop.permute.xlu0 %1590
  %v1594 = vadd.f32 %v1564, %v1589
  %v1595 = vadd.f32 %v1565, %v1591
  %s1596 = scalar_lea.vmem %s7, 256
  %v1597 = vld [vmem:[%s1596] sm:$0xff]
  %v1598 = vld [vmem:[%s1596 + $0x8] sm:$0xff]
  %1600 = vset.pattern.permute.xlu0 0
  %1601 = vperm.xlu0 %1600, %v1597
  %v1602 = vpop.permute.xlu0 %1601
  %1605 = vset.pattern.permute.xlu0 0
  %1606 = vperm.xlu0 %1605, %v1598
  %v1607 = vpop.permute.xlu0 %1606
  %v1609 = vlaneseq
  %v1610 = vshrl.u32 %v1609, 7
  %v1611 = vsub.s32 0, %v1610
  %v1612 = vrot.slane %v1164, %v1611
  %v1613 = vmul.f32 %v1602, %v1612
  %v1614 = vmul.f32 %v1607, %v1612
  %1617 = vrot.lane.b32.xlu0 %v1613, 124
  %v1618 = vpop.permute.xlu0 %1617
  %1619 = vrot.lane.b32.xlu0 %v1614, 124
  %v1620 = vpop.permute.xlu0 %1619
  %v1623 = vadd.f32 %v1594, %v1618
  %v1624 = vadd.f32 %v1595, %v1620
  %s1625 = scalar_lea.vmem %s7, 272
  %v1626 = vld [vmem:[%s1625] sm:$0xff]
  %v1627 = vld [vmem:[%s1625 + $0x8] sm:$0xff]
  %1629 = vset.pattern.permute.xlu0 0
  %1630 = vperm.xlu0 %1629, %v1626
  %v1631 = vpop.permute.xlu0 %1630
  %1634 = vset.pattern.permute.xlu0 0
  %1635 = vperm.xlu0 %1634, %v1627
  %v1636 = vpop.permute.xlu0 %1635
  %v1638 = vlaneseq
  %v1639 = vshrl.u32 %v1638, 7
  %v1640 = vsub.s32 0, %v1639
  %v1641 = vrot.slane %v1184, %v1640
  %v1642 = vmul.f32 %v1631, %v1641
  %v1643 = vmul.f32 %v1636, %v1641
  %1646 = vrot.lane.b32.xlu0 %v1642, 124
  %v1647 = vpop.permute.xlu0 %1646
  %1648 = vrot.lane.b32.xlu0 %v1643, 124
  %v1649 = vpop.permute.xlu0 %1648
  %v1652 = vadd.f32 %v1623, %v1647
  %v1653 = vadd.f32 %v1624, %v1649
  %s1654 = scalar_lea.vmem %s7, 288
  %v1655 = vld [vmem:[%s1654] sm:$0xff]
  %v1656 = vld [vmem:[%s1654 + $0x8] sm:$0xff]
  %1658 = vset.pattern.permute.xlu0 0
  %1659 = vperm.xlu0 %1658, %v1655
  %v1660 = vpop.permute.xlu0 %1659
  %1663 = vset.pattern.permute.xlu0 0
  %1664 = vperm.xlu0 %1663, %v1656
  %v1665 = vpop.permute.xlu0 %1664
  %v1667 = vlaneseq
  %v1668 = vshrl.u32 %v1667, 7
  %v1669 = vsub.s32 0, %v1668
  %v1670 = vrot.slane %v1207, %v1669
  %v1671 = vmul.f32 %v1660, %v1670
  %v1672 = vmul.f32 %v1665, %v1670
  %1675 = vrot.lane.b32.xlu0 %v1671, 124
  %v1676 = vpop.permute.xlu0 %1675
  %1677 = vrot.lane.b32.xlu0 %v1672, 124
  %v1678 = vpop.permute.xlu0 %1677
  %v1681 = vadd.f32 %v1652, %v1676
  %v1682 = vadd.f32 %v1653, %v1678
  %s1683 = scalar_lea.vmem %s7, 304
  %v1684 = vld [vmem:[%s1683] sm:$0xff]
  %v1685 = vld [vmem:[%s1683 + $0x8] sm:$0xff]
  %1687 = vset.pattern.permute.xlu0 0
  %1688 = vperm.xlu0 %1687, %v1684
  %v1689 = vpop.permute.xlu0 %1688
  %1692 = vset.pattern.permute.xlu0 0
  %1693 = vperm.xlu0 %1692, %v1685
  %v1694 = vpop.permute.xlu0 %1693
  %v1696 = vlaneseq
  %v1697 = vshrl.u32 %v1696, 7
  %v1698 = vsub.s32 0, %v1697
  %v1699 = vrot.slane %v1230, %v1698
  %v1700 = vmul.f32 %v1689, %v1699
  %v1701 = vmul.f32 %v1694, %v1699
  %1704 = vrot.lane.b32.xlu0 %v1700, 124
  %v1705 = vpop.permute.xlu0 %1704
  %1706 = vrot.lane.b32.xlu0 %v1701, 124
  %v1707 = vpop.permute.xlu0 %1706
  %v1710 = vadd.f32 %v1681, %v1705
  %v1711 = vadd.f32 %v1682, %v1707
  %s1712 = scalar_lea.vmem %s7, 320
  %v1713 = vld [vmem:[%s1712] sm:$0xff]
  %v1714 = vld [vmem:[%s1712 + $0x8] sm:$0xff]
  %1716 = vset.pattern.permute.xlu0 0
  %1717 = vperm.xlu0 %1716, %v1713
  %v1718 = vpop.permute.xlu0 %1717
  %1721 = vset.pattern.permute.xlu0 0
  %1722 = vperm.xlu0 %1721, %v1714
  %v1723 = vpop.permute.xlu0 %1722
  %v1725 = vlaneseq
  %v1726 = vshrl.u32 %v1725, 7
  %v1727 = vsub.s32 0, %v1726
  %v1728 = vrot.slane %v1253, %v1727
  %v1729 = vmul.f32 %v1718, %v1728
  %v1730 = vmul.f32 %v1723, %v1728
  %1733 = vrot.lane.b32.xlu0 %v1729, 124
  %v1734 = vpop.permute.xlu0 %1733
  %1735 = vrot.lane.b32.xlu0 %v1730, 124
  %v1736 = vpop.permute.xlu0 %1735
  %v1739 = vadd.f32 %v1710, %v1734
  %v1740 = vadd.f32 %v1711, %v1736
  %s1741 = scalar_lea.vmem %s7, 336
  %v1742 = vld [vmem:[%s1741] sm:$0xff]
  %v1743 = vld [vmem:[%s1741 + $0x8] sm:$0xff]
  %1745 = vset.pattern.permute.xlu0 0
  %1746 = vperm.xlu0 %1745, %v1742
  %v1747 = vpop.permute.xlu0 %1746
  %1750 = vset.pattern.permute.xlu0 0
  %1751 = vperm.xlu0 %1750, %v1743
  %v1752 = vpop.permute.xlu0 %1751
  %v1754 = vlaneseq
  %v1755 = vshrl.u32 %v1754, 7
  %v1756 = vsub.s32 0, %v1755
  %v1757 = vrot.slane %v1276, %v1756
  %v1758 = vmul.f32 %v1747, %v1757
  %v1759 = vmul.f32 %v1752, %v1757
  %1762 = vrot.lane.b32.xlu0 %v1758, 124
  %v1763 = vpop.permute.xlu0 %1762
  %1764 = vrot.lane.b32.xlu0 %v1759, 124
  %v1765 = vpop.permute.xlu0 %1764
  %v1768 = vadd.f32 %v1739, %v1763
  %v1769 = vadd.f32 %v1740, %v1765
  %s1770 = scalar_lea.vmem %s7, 352
  %v1771 = vld [vmem:[%s1770] sm:$0xff]
  %v1772 = vld [vmem:[%s1770 + $0x8] sm:$0xff]
  %1774 = vset.pattern.permute.xlu0 0
  %1775 = vperm.xlu0 %1774, %v1771
  %v1776 = vpop.permute.xlu0 %1775
  %1779 = vset.pattern.permute.xlu0 0
  %1780 = vperm.xlu0 %1779, %v1772
  %v1781 = vpop.permute.xlu0 %1780
  %v1783 = vlaneseq
  %v1784 = vshrl.u32 %v1783, 7
  %v1785 = vsub.s32 0, %v1784
  %v1786 = vrot.slane %v1299, %v1785
  %v1787 = vmul.f32 %v1776, %v1786
  %v1788 = vmul.f32 %v1781, %v1786
  %1791 = vrot.lane.b32.xlu0 %v1787, 124
  %v1792 = vpop.permute.xlu0 %1791
  %1793 = vrot.lane.b32.xlu0 %v1788, 124
  %v1794 = vpop.permute.xlu0 %1793
  %v1797 = vadd.f32 %v1768, %v1792
  %v1798 = vadd.f32 %v1769, %v1794
  %s1799 = scalar_lea.vmem %s7, 368
  %v1800 = vld [vmem:[%s1799] sm:$0xff]
  %v1801 = vld [vmem:[%s1799 + $0x8] sm:$0xff]
  %1803 = vset.pattern.permute.xlu0 0
  %1804 = vperm.xlu0 %1803, %v1800
  %v1805 = vpop.permute.xlu0 %1804
  %1808 = vset.pattern.permute.xlu0 0
  %1809 = vperm.xlu0 %1808, %v1801
  %v1810 = vpop.permute.xlu0 %1809
  %v1812 = vlaneseq
  %v1813 = vshrl.u32 %v1812, 7
  %v1814 = vsub.s32 0, %v1813
  %v1815 = vrot.slane %v1322, %v1814
  %v1816 = vmul.f32 %v1805, %v1815
  %v1817 = vmul.f32 %v1810, %v1815
  %1820 = vrot.lane.b32.xlu0 %v1816, 124
  %v1821 = vpop.permute.xlu0 %1820
  %1822 = vrot.lane.b32.xlu0 %v1817, 124
  %v1823 = vpop.permute.xlu0 %1822
  %v1826 = vadd.f32 %v1797, %v1821
  %v1827 = vadd.f32 %v1798, %v1823
  %v1828 = vld [vmem:[%s8] sm:$0xff]
  %v1829 = vld [vmem:[%s8 + $0x8] sm:$0xff]
  %1831 = vset.pattern.permute.xlu0 0
  %1832 = vperm.xlu0 %1831, %v1828
  %v1833 = vpop.permute.xlu0 %1832
  %1836 = vset.pattern.permute.xlu0 0
  %1837 = vperm.xlu0 %1836, %v1829
  %v1838 = vpop.permute.xlu0 %1837
  %v1840 = vadd.f32 %v1826, %v1833
  %v1841 = vadd.f32 %v1827, %v1838
  %v1842 = vmax.f32 %v1840, 0.0
  %v1843 = vmax.f32 %v1841, 0.0
  %1846 = vrot.lane.b32.xlu0 %v1842, 126
  %v1847 = vpop.permute.xlu0 %1846
  %1848 = vrot.lane.b32.xlu0 %v1843, 126
  %v1849 = vpop.permute.xlu0 %1848
  %1852 = vrot.lane.b32.xlu0 %v1842, 124
  %v1853 = vpop.permute.xlu0 %1852
  %1854 = vrot.lane.b32.xlu0 %v1843, 124
  %v1855 = vpop.permute.xlu0 %1854
  %1858 = vrot.lane.b32.xlu0 %v1842, 122
  %v1859 = vpop.permute.xlu0 %1858
  %1860 = vrot.lane.b32.xlu0 %v1843, 122
  %v1861 = vpop.permute.xlu0 %1860
  %1864 = vrot.lane.b32.xlu0 %v1842, 120
  %v1865 = vpop.permute.xlu0 %1864
  %1866 = vrot.lane.b32.xlu0 %v1843, 120
  %v1867 = vpop.permute.xlu0 %1866
  %1870 = vrot.lane.b32.xlu0 %v1842, 118
  %v1871 = vpop.permute.xlu0 %1870
  %1872 = vrot.lane.b32.xlu0 %v1843, 118
  %v1873 = vpop.permute.xlu0 %1872
  %1876 = vrot.lane.b32.xlu0 %v1842, 116
  %v1877 = vpop.permute.xlu0 %1876
  %1878 = vrot.lane.b32.xlu0 %v1843, 116
  %v1879 = vpop.permute.xlu0 %1878
  %1882 = vrot.lane.b32.xlu0 %v1842, 114
  %v1883 = vpop.permute.xlu0 %1882
  %1884 = vrot.lane.b32.xlu0 %v1843, 114
  %v1885 = vpop.permute.xlu0 %1884
  %v1888 = vcombine.low %v1842, %v1853
  %v1889 = vcombine.high %v1842, %v1853
  %v1891 = vunpack.c.l.s4 1983009808
  %v1892 = vunpack.c.0.s8 %v1891
  %v1893 = vlaneseq
  %v1894 = vshrl.u32 %v1893, 7
  %v1895 = vsub.s32 %v1892, %v1894
  %v1896 = vrot.slane %v1888, %v1895
  %v1898 = vunpack.c.l.s4 1983009808
  %v1899 = vunpack.c.0.s8 %v1898
  %v1900 = vlaneseq
  %v1901 = vshrl.u32 %v1900, 7
  %v1902 = vsub.s32 %v1899, %v1901
  %v1903 = vrot.slane %v1889, %v1902
  %v1904 = vcombine.low %v1847, %v1859
  %v1905 = vcombine.high %v1847, %v1859
  %v1907 = vunpack.c.l.s4 1983009808
  %v1908 = vunpack.c.0.s8 %v1907
  %v1909 = vlaneseq
  %v1910 = vshrl.u32 %v1909, 7
  %v1911 = vsub.s32 %v1908, %v1910
  %v1912 = vrot.slane %v1904, %v1911
  %v1914 = vunpack.c.l.s4 1983009808
  %v1915 = vunpack.c.0.s8 %v1914
  %v1916 = vlaneseq
  %v1917 = vshrl.u32 %v1916, 7
  %v1918 = vsub.s32 %v1915, %v1917
  %v1919 = vrot.slane %v1905, %v1918
  %v1920 = vcombine.low %v1865, %v1877
  %v1921 = vcombine.high %v1865, %v1877
  %v1923 = vunpack.c.l.s4 1983009808
  %v1924 = vunpack.c.0.s8 %v1923
  %v1925 = vlaneseq
  %v1926 = vshrl.u32 %v1925, 7
  %v1927 = vsub.s32 %v1924, %v1926
  %v1928 = vrot.slane %v1920, %v1927
  %v1930 = vunpack.c.l.s4 1983009808
  %v1931 = vunpack.c.0.s8 %v1930
  %v1932 = vlaneseq
  %v1933 = vshrl.u32 %v1932, 7
  %v1934 = vsub.s32 %v1931, %v1933
  %v1935 = vrot.slane %v1921, %v1934
  %v1936 = vcombine.low %v1871, %v1883
  %v1937 = vcombine.high %v1871, %v1883
  %v1939 = vunpack.c.l.s4 1983009808
  %v1940 = vunpack.c.0.s8 %v1939
  %v1941 = vlaneseq
  %v1942 = vshrl.u32 %v1941, 7
  %v1943 = vsub.s32 %v1940, %v1942
  %v1944 = vrot.slane %v1936, %v1943
  %v1946 = vunpack.c.l.s4 1983009808
  %v1947 = vunpack.c.0.s8 %v1946
  %v1948 = vlaneseq
  %v1949 = vshrl.u32 %v1948, 7
  %v1950 = vsub.s32 %v1947, %v1949
  %v1951 = vrot.slane %v1937, %v1950
  %v1952 = vcombine.low %v1896, %v1912
  %v1953 = vcombine.high %v1896, %v1912
  %v1955 = vunpack.c.l.s4 1934713408
  %v1956 = vunpack.c.0.s8 %v1955
  %v1957 = vlaneseq
  %v1958 = vshrl.u32 %v1957, 7
  %v1959 = vsub.s32 %v1956, %v1958
  %v1960 = vrot.slane %v1952, %v1959
  %v1962 = vunpack.c.l.s4 1934713408
  %v1963 = vunpack.c.0.s8 %v1962
  %v1964 = vlaneseq
  %v1965 = vshrl.u32 %v1964, 7
  %v1966 = vsub.s32 %v1963, %v1965
  %v1967 = vrot.slane %v1953, %v1966
  %v1968 = vcombine.low %v1903, %v1919
  %v1969 = vcombine.high %v1903, %v1919
  %v1971 = vunpack.c.l.s4 1934713408
  %v1972 = vunpack.c.0.s8 %v1971
  %v1973 = vlaneseq
  %v1974 = vshrl.u32 %v1973, 7
  %v1975 = vsub.s32 %v1972, %v1974
  %v1976 = vrot.slane %v1968, %v1975
  %v1978 = vunpack.c.l.s4 1934713408
  %v1979 = vunpack.c.0.s8 %v1978
  %v1980 = vlaneseq
  %v1981 = vshrl.u32 %v1980, 7
  %v1982 = vsub.s32 %v1979, %v1981
  %v1983 = vrot.slane %v1969, %v1982
  %v1984 = vcombine.low %v1928, %v1944
  %v1985 = vcombine.high %v1928, %v1944
  %v1987 = vunpack.c.l.s4 1934713408
  %v1988 = vunpack.c.0.s8 %v1987
  %v1989 = vlaneseq
  %v1990 = vshrl.u32 %v1989, 7
  %v1991 = vsub.s32 %v1988, %v1990
  %v1992 = vrot.slane %v1984, %v1991
  %v1994 = vunpack.c.l.s4 1934713408
  %v1995 = vunpack.c.0.s8 %v1994
  %v1996 = vlaneseq
  %v1997 = vshrl.u32 %v1996, 7
  %v1998 = vsub.s32 %v1995, %v1997
  %v1999 = vrot.slane %v1985, %v1998
  %v2000 = vcombine.low %v1935, %v1951
  %v2001 = vcombine.high %v1935, %v1951
  %v2003 = vunpack.c.l.s4 1934713408
  %v2004 = vunpack.c.0.s8 %v2003
  %v2005 = vlaneseq
  %v2006 = vshrl.u32 %v2005, 7
  %v2007 = vsub.s32 %v2004, %v2006
  %v2008 = vrot.slane %v2000, %v2007
  %v2010 = vunpack.c.l.s4 1934713408
  %v2011 = vunpack.c.0.s8 %v2010
  %v2012 = vlaneseq
  %v2013 = vshrl.u32 %v2012, 7
  %v2014 = vsub.s32 %v2011, %v2013
  %v2015 = vrot.slane %v2001, %v2014
  %v2016 = vcombine.low %v1960, %v1992
  %v2017 = vcombine.high %v1960, %v1992
  %v2018 = vcombine.low %v1967, %v1999
  %v2019 = vcombine.high %v1967, %v1999
  %v2020 = vcombine.low %v1976, %v2008
  %v2021 = vcombine.high %v1976, %v2008
  %v2022 = vcombine.low %v1983, %v2015
  %v2023 = vcombine.high %v1983, %v2015
  %v2024 = vcombine.low %v1843, %v1855
  %v2025 = vcombine.high %v1843, %v1855
  %v2027 = vunpack.c.l.s4 1983009808
  %v2028 = vunpack.c.0.s8 %v2027
  %v2029 = vlaneseq
  %v2030 = vshrl.u32 %v2029, 7
  %v2031 = vsub.s32 %v2028, %v2030
  %v2032 = vrot.slane %v2024, %v2031
  %v2034 = vunpack.c.l.s4 1983009808
  %v2035 = vunpack.c.0.s8 %v2034
  %v2036 = vlaneseq
  %v2037 = vshrl.u32 %v2036, 7
  %v2038 = vsub.s32 %v2035, %v2037
  %v2039 = vrot.slane %v2025, %v2038
  %v2040 = vcombine.low %v1849, %v1861
  %v2041 = vcombine.high %v1849, %v1861
  %v2043 = vunpack.c.l.s4 1983009808
  %v2044 = vunpack.c.0.s8 %v2043
  %v2045 = vlaneseq
  %v2046 = vshrl.u32 %v2045, 7
  %v2047 = vsub.s32 %v2044, %v2046
  %v2048 = vrot.slane %v2040, %v2047
  %v2050 = vunpack.c.l.s4 1983009808
  %v2051 = vunpack.c.0.s8 %v2050
  %v2052 = vlaneseq
  %v2053 = vshrl.u32 %v2052, 7
  %v2054 = vsub.s32 %v2051, %v2053
  %v2055 = vrot.slane %v2041, %v2054
  %v2056 = vcombine.low %v1867, %v1879
  %v2057 = vcombine.high %v1867, %v1879
  %v2059 = vunpack.c.l.s4 1983009808
  %v2060 = vunpack.c.0.s8 %v2059
  %v2061 = vlaneseq
  %v2062 = vshrl.u32 %v2061, 7
  %v2063 = vsub.s32 %v2060, %v2062
  %v2064 = vrot.slane %v2056, %v2063
  %v2066 = vunpack.c.l.s4 1983009808
  %v2067 = vunpack.c.0.s8 %v2066
  %v2068 = vlaneseq
  %v2069 = vshrl.u32 %v2068, 7
  %v2070 = vsub.s32 %v2067, %v2069
  %v2071 = vrot.slane %v2057, %v2070
  %v2072 = vcombine.low %v1873, %v1885
  %v2073 = vcombine.high %v1873, %v1885
  %v2075 = vunpack.c.l.s4 1983009808
  %v2076 = vunpack.c.0.s8 %v2075
  %v2077 = vlaneseq
  %v2078 = vshrl.u32 %v2077, 7
  %v2079 = vsub.s32 %v2076, %v2078
  %v2080 = vrot.slane %v2072, %v2079
  %v2082 = vunpack.c.l.s4 1983009808
  %v2083 = vunpack.c.0.s8 %v2082
  %v2084 = vlaneseq
  %v2085 = vshrl.u32 %v2084, 7
  %v2086 = vsub.s32 %v2083, %v2085
  %v2087 = vrot.slane %v2073, %v2086
  %v2088 = vcombine.low %v2032, %v2048
  %v2089 = vcombine.high %v2032, %v2048
  %v2091 = vunpack.c.l.s4 1934713408
  %v2092 = vunpack.c.0.s8 %v2091
  %v2093 = vlaneseq
  %v2094 = vshrl.u32 %v2093, 7
  %v2095 = vsub.s32 %v2092, %v2094
  %v2096 = vrot.slane %v2088, %v2095
  %v2098 = vunpack.c.l.s4 1934713408
  %v2099 = vunpack.c.0.s8 %v2098
  %v2100 = vlaneseq
  %v2101 = vshrl.u32 %v2100, 7
  %v2102 = vsub.s32 %v2099, %v2101
  %v2103 = vrot.slane %v2089, %v2102
  %v2104 = vcombine.low %v2039, %v2055
  %v2105 = vcombine.high %v2039, %v2055
  %v2107 = vunpack.c.l.s4 1934713408
  %v2108 = vunpack.c.0.s8 %v2107
  %v2109 = vlaneseq
  %v2110 = vshrl.u32 %v2109, 7
  %v2111 = vsub.s32 %v2108, %v2110
  %v2112 = vrot.slane %v2104, %v2111
  %v2114 = vunpack.c.l.s4 1934713408
  %v2115 = vunpack.c.0.s8 %v2114
  %v2116 = vlaneseq
  %v2117 = vshrl.u32 %v2116, 7
  %v2118 = vsub.s32 %v2115, %v2117
  %v2119 = vrot.slane %v2105, %v2118
  %v2120 = vcombine.low %v2064, %v2080
  %v2121 = vcombine.high %v2064, %v2080
  %v2123 = vunpack.c.l.s4 1934713408
  %v2124 = vunpack.c.0.s8 %v2123
  %v2125 = vlaneseq
  %v2126 = vshrl.u32 %v2125, 7
  %v2127 = vsub.s32 %v2124, %v2126
  %v2128 = vrot.slane %v2120, %v2127
  %v2130 = vunpack.c.l.s4 1934713408
  %v2131 = vunpack.c.0.s8 %v2130
  %v2132 = vlaneseq
  %v2133 = vshrl.u32 %v2132, 7
  %v2134 = vsub.s32 %v2131, %v2133
  %v2135 = vrot.slane %v2121, %v2134
  %v2136 = vcombine.low %v2071, %v2087
  %v2137 = vcombine.high %v2071, %v2087
  %v2139 = vunpack.c.l.s4 1934713408
  %v2140 = vunpack.c.0.s8 %v2139
  %v2141 = vlaneseq
  %v2142 = vshrl.u32 %v2141, 7
  %v2143 = vsub.s32 %v2140, %v2142
  %v2144 = vrot.slane %v2136, %v2143
  %v2146 = vunpack.c.l.s4 1934713408
  %v2147 = vunpack.c.0.s8 %v2146
  %v2148 = vlaneseq
  %v2149 = vshrl.u32 %v2148, 7
  %v2150 = vsub.s32 %v2147, %v2149
  %v2151 = vrot.slane %v2137, %v2150
  %v2152 = vcombine.low %v2096, %v2128
  %v2153 = vcombine.high %v2096, %v2128
  %v2154 = vcombine.low %v2103, %v2135
  %v2155 = vcombine.high %v2103, %v2135
  %v2156 = vcombine.low %v2112, %v2144
  %v2157 = vcombine.high %v2112, %v2144
  %v2158 = vcombine.low %v2119, %v2151
  %v2159 = vcombine.high %v2119, %v2151
  %v2160 = vsel %vm586, %v2016, 0.0
  %2161 = vadd.xlane.f32.xlu0 %v2160
  %v2162 = vpop.xlane.xlu0 %2161
  %v2163 = vsel %vm586, %v2017, 0.0
  %2164 = vadd.xlane.f32.xlu0 %v2163
  %v2165 = vpop.xlane.xlu0 %2164
  %v2166 = vsel %vm586, %v2018, 0.0
  %2167 = vadd.xlane.f32.xlu0 %v2166
  %v2168 = vpop.xlane.xlu0 %2167
  %v2169 = vsel %vm586, %v2019, 0.0
  %2170 = vadd.xlane.f32.xlu0 %v2169
  %v2171 = vpop.xlane.xlu0 %2170
  %v2172 = vsel %vm586, %v2020, 0.0
  %2173 = vadd.xlane.f32.xlu0 %v2172
  %v2174 = vpop.xlane.xlu0 %2173
  %v2175 = vsel %vm586, %v2021, 0.0
  %2176 = vadd.xlane.f32.xlu0 %v2175
  %v2177 = vpop.xlane.xlu0 %2176
  %v2178 = vsel %vm586, %v2022, 0.0
  %2179 = vadd.xlane.f32.xlu0 %v2178
  %v2180 = vpop.xlane.xlu0 %2179
  %v2181 = vsel %vm586, %v2023, 0.0
  %2182 = vadd.xlane.f32.xlu0 %v2181
  %v2183 = vpop.xlane.xlu0 %2182
  %v2184 = vsel %vm586, %v2152, 0.0
  %2185 = vadd.xlane.f32.xlu0 %v2184
  %v2186 = vpop.xlane.xlu0 %2185
  %v2187 = vsel %vm586, %v2153, 0.0
  %2188 = vadd.xlane.f32.xlu0 %v2187
  %v2189 = vpop.xlane.xlu0 %2188
  %v2190 = vsel %vm586, %v2154, 0.0
  %2191 = vadd.xlane.f32.xlu0 %v2190
  %v2192 = vpop.xlane.xlu0 %2191
  %v2193 = vsel %vm586, %v2155, 0.0
  %2194 = vadd.xlane.f32.xlu0 %v2193
  %v2195 = vpop.xlane.xlu0 %2194
  %v2196 = vsel %vm586, %v2156, 0.0
  %2197 = vadd.xlane.f32.xlu0 %v2196
  %v2198 = vpop.xlane.xlu0 %2197
  %v2199 = vsel %vm586, %v2157, 0.0
  %2200 = vadd.xlane.f32.xlu0 %v2199
  %v2201 = vpop.xlane.xlu0 %2200
  %v2202 = vsel %vm586, %v2158, 0.0
  %2203 = vadd.xlane.f32.xlu0 %v2202
  %v2204 = vpop.xlane.xlu0 %2203
  %v2205 = vsel %vm586, %v2159, 0.0
  %2206 = vadd.xlane.f32.xlu0 %v2205
  %v2207 = vpop.xlane.xlu0 %2206
  %v2208 = vmul.f32 %v2162, 0.5
  %v2209 = vmul.f32 %v2165, 0.5
  %v2210 = vmul.f32 %v2168, 0.5
  %v2211 = vmul.f32 %v2171, 0.5
  %v2212 = vmul.f32 %v2174, 0.5
  %v2213 = vmul.f32 %v2177, 0.5
  %v2214 = vmul.f32 %v2180, 0.5
  %v2215 = vmul.f32 %v2183, 0.5
  %v2216 = vmul.f32 %v2186, 0.5
  %v2217 = vmul.f32 %v2189, 0.5
  %v2218 = vmul.f32 %v2192, 0.5
  %v2219 = vmul.f32 %v2195, 0.5
  %v2220 = vmul.f32 %v2198, 0.5
  %v2221 = vmul.f32 %v2201, 0.5
  %v2222 = vmul.f32 %v2204, 0.5
  %v2223 = vmul.f32 %v2207, 0.5
  %v2240 = vlaneseq
  %v2241 = vshrl.u32 %v2240, 7
  %v2242 = vsub.s32 %v668, %v2241
  %v2243 = vrot.slane %v2208, %v2242
  %v2244 = vlaneseq
  %v2245 = vshrl.u32 %v2244, 7
  %v2246 = vsub.s32 %v668, %v2245
  %v2247 = vrot.slane %v2209, %v2246
  %v2248 = vlaneseq
  %v2249 = vshrl.u32 %v2248, 7
  %v2250 = vsub.s32 %v668, %v2249
  %v2251 = vrot.slane %v2210, %v2250
  %v2252 = vlaneseq
  %v2253 = vshrl.u32 %v2252, 7
  %v2254 = vsub.s32 %v668, %v2253
  %v2255 = vrot.slane %v2211, %v2254
  %v2256 = vlaneseq
  %v2257 = vshrl.u32 %v2256, 7
  %v2258 = vsub.s32 %v668, %v2257
  %v2259 = vrot.slane %v2212, %v2258
  %v2260 = vlaneseq
  %v2261 = vshrl.u32 %v2260, 7
  %v2262 = vsub.s32 %v668, %v2261
  %v2263 = vrot.slane %v2213, %v2262
  %v2264 = vlaneseq
  %v2265 = vshrl.u32 %v2264, 7
  %v2266 = vsub.s32 %v668, %v2265
  %v2267 = vrot.slane %v2214, %v2266
  %v2268 = vlaneseq
  %v2269 = vshrl.u32 %v2268, 7
  %v2270 = vsub.s32 %v668, %v2269
  %v2271 = vrot.slane %v2215, %v2270
  %v2272 = vlaneseq
  %v2273 = vshrl.u32 %v2272, 7
  %v2274 = vsub.s32 %v668, %v2273
  %v2275 = vrot.slane %v2216, %v2274
  %v2276 = vlaneseq
  %v2277 = vshrl.u32 %v2276, 7
  %v2278 = vsub.s32 %v668, %v2277
  %v2279 = vrot.slane %v2217, %v2278
  %v2280 = vlaneseq
  %v2281 = vshrl.u32 %v2280, 7
  %v2282 = vsub.s32 %v668, %v2281
  %v2283 = vrot.slane %v2218, %v2282
  %v2284 = vlaneseq
  %v2285 = vshrl.u32 %v2284, 7
  %v2286 = vsub.s32 %v668, %v2285
  %v2287 = vrot.slane %v2219, %v2286
  %v2288 = vlaneseq
  %v2289 = vshrl.u32 %v2288, 7
  %v2290 = vsub.s32 %v668, %v2289
  %v2291 = vrot.slane %v2220, %v2290
  %v2292 = vlaneseq
  %v2293 = vshrl.u32 %v2292, 7
  %v2294 = vsub.s32 %v668, %v2293
  %v2295 = vrot.slane %v2221, %v2294
  %v2296 = vlaneseq
  %v2297 = vshrl.u32 %v2296, 7
  %v2298 = vsub.s32 %v668, %v2297
  %v2299 = vrot.slane %v2222, %v2298
  %v2300 = vlaneseq
  %v2301 = vshrl.u32 %v2300, 7
  %v2302 = vsub.s32 %v668, %v2301
  %v2303 = vrot.slane %v2223, %v2302
  %v2304 = vsel %vm743, %v2247, %v2243
  %v2305 = vsel %vm745, %v2251, %v2304
  %v2306 = vsel %vm747, %v2255, %v2305
  %v2307 = vsel %vm749, %v2259, %v2306
  %v2308 = vsel %vm751, %v2263, %v2307
  %v2309 = vsel %vm753, %v2267, %v2308
  %v2310 = vsel %vm755, %v2271, %v2309
  %v2311 = vsel %vm743, %v2279, %v2275
  %v2312 = vsel %vm745, %v2283, %v2311
  %v2313 = vsel %vm747, %v2287, %v2312
  %v2314 = vsel %vm749, %v2291, %v2313
  %v2315 = vsel %vm751, %v2295, %v2314
  %v2316 = vsel %vm753, %v2299, %v2315
  %v2317 = vsel %vm755, %v2303, %v2316
  %vm2320 = vcmask 64512
  %v2321 = vsel %vm2320, %v2310, 0.0
  %2322 = vadd.xlane.f32.xlu0 %v2321
  %v2323 = vpop.xlane.xlu0 %2322
  %v2324 = vsel %vm2320, %v2317, 0.0
  %2325 = vadd.xlane.f32.xlu0 %v2324
  %v2326 = vpop.xlane.xlu0 %2325
  %v2327 = vmul.f32 %v2323, 0.125
  %v2328 = vmul.f32 %v2326, 0.125
  %v2329 = vmul.f32 %v2208, %v2208
  %v2330 = vmul.f32 %v2209, %v2209
  %v2331 = vmul.f32 %v2210, %v2210
  %v2332 = vmul.f32 %v2211, %v2211
  %v2333 = vmul.f32 %v2212, %v2212
  %v2334 = vmul.f32 %v2213, %v2213
  %v2335 = vmul.f32 %v2214, %v2214
  %v2336 = vmul.f32 %v2215, %v2215
  %v2337 = vmul.f32 %v2216, %v2216
  %v2338 = vmul.f32 %v2217, %v2217
  %v2339 = vmul.f32 %v2218, %v2218
  %v2340 = vmul.f32 %v2219, %v2219
  %v2341 = vmul.f32 %v2220, %v2220
  %v2342 = vmul.f32 %v2221, %v2221
  %v2343 = vmul.f32 %v2222, %v2222
  %v2344 = vmul.f32 %v2223, %v2223
  %v2361 = vlaneseq
  %v2362 = vshrl.u32 %v2361, 7
  %v2363 = vsub.s32 %v668, %v2362
  %v2364 = vrot.slane %v2329, %v2363
  %v2365 = vlaneseq
  %v2366 = vshrl.u32 %v2365, 7
  %v2367 = vsub.s32 %v668, %v2366
  %v2368 = vrot.slane %v2330, %v2367
  %v2369 = vlaneseq
  %v2370 = vshrl.u32 %v2369, 7
  %v2371 = vsub.s32 %v668, %v2370
  %v2372 = vrot.slane %v2331, %v2371
  %v2373 = vlaneseq
  %v2374 = vshrl.u32 %v2373, 7
  %v2375 = vsub.s32 %v668, %v2374
  %v2376 = vrot.slane %v2332, %v2375
  %v2377 = vlaneseq
  %v2378 = vshrl.u32 %v2377, 7
  %v2379 = vsub.s32 %v668, %v2378
  %v2380 = vrot.slane %v2333, %v2379
  %v2381 = vlaneseq
  %v2382 = vshrl.u32 %v2381, 7
  %v2383 = vsub.s32 %v668, %v2382
  %v2384 = vrot.slane %v2334, %v2383
  %v2385 = vlaneseq
  %v2386 = vshrl.u32 %v2385, 7
  %v2387 = vsub.s32 %v668, %v2386
  %v2388 = vrot.slane %v2335, %v2387
  %v2389 = vlaneseq
  %v2390 = vshrl.u32 %v2389, 7
  %v2391 = vsub.s32 %v668, %v2390
  %v2392 = vrot.slane %v2336, %v2391
  %v2393 = vlaneseq
  %v2394 = vshrl.u32 %v2393, 7
  %v2395 = vsub.s32 %v668, %v2394
  %v2396 = vrot.slane %v2337, %v2395
  %v2397 = vlaneseq
  %v2398 = vshrl.u32 %v2397, 7
  %v2399 = vsub.s32 %v668, %v2398
  %v2400 = vrot.slane %v2338, %v2399
  %v2401 = vlaneseq
  %v2402 = vshrl.u32 %v2401, 7
  %v2403 = vsub.s32 %v668, %v2402
  %v2404 = vrot.slane %v2339, %v2403
  %v2405 = vlaneseq
  %v2406 = vshrl.u32 %v2405, 7
  %v2407 = vsub.s32 %v668, %v2406
  %v2408 = vrot.slane %v2340, %v2407
  %v2409 = vlaneseq
  %v2410 = vshrl.u32 %v2409, 7
  %v2411 = vsub.s32 %v668, %v2410
  %v2412 = vrot.slane %v2341, %v2411
  %v2413 = vlaneseq
  %v2414 = vshrl.u32 %v2413, 7
  %v2415 = vsub.s32 %v668, %v2414
  %v2416 = vrot.slane %v2342, %v2415
  %v2417 = vlaneseq
  %v2418 = vshrl.u32 %v2417, 7
  %v2419 = vsub.s32 %v668, %v2418
  %v2420 = vrot.slane %v2343, %v2419
  %v2421 = vlaneseq
  %v2422 = vshrl.u32 %v2421, 7
  %v2423 = vsub.s32 %v668, %v2422
  %v2424 = vrot.slane %v2344, %v2423
  %v2425 = vsel %vm743, %v2368, %v2364
  %v2426 = vsel %vm745, %v2372, %v2425
  %v2427 = vsel %vm747, %v2376, %v2426
  %v2428 = vsel %vm749, %v2380, %v2427
  %v2429 = vsel %vm751, %v2384, %v2428
  %v2430 = vsel %vm753, %v2388, %v2429
  %v2431 = vsel %vm755, %v2392, %v2430
  %v2432 = vsel %vm743, %v2400, %v2396
  %v2433 = vsel %vm745, %v2404, %v2432
  %v2434 = vsel %vm747, %v2408, %v2433
  %v2435 = vsel %vm749, %v2412, %v2434
  %v2436 = vsel %vm751, %v2416, %v2435
  %v2437 = vsel %vm753, %v2420, %v2436
  %v2438 = vsel %vm755, %v2424, %v2437
  %v2441 = vsel %vm2320, %v2431, 0.0
  %2442 = vadd.xlane.f32.xlu0 %v2441
  %v2443 = vpop.xlane.xlu0 %2442
  %v2444 = vsel %vm2320, %v2438, 0.0
  %2445 = vadd.xlane.f32.xlu0 %v2444
  %v2446 = vpop.xlane.xlu0 %2445
  %v2447 = vmul.f32 %v2443, 0.125
  %v2448 = vmul.f32 %v2446, 0.125
  %v2449 = vmul.f32 %v2327, %v2327
  %v2450 = vmul.f32 %v2328, %v2328
  %v2451 = vsub.f32 %v2447, %v2449
  %v2452 = vsub.f32 %v2448, %v2450
  %v2453 = vmax.f32 %v2451, 0.0
  %v2454 = vmax.f32 %v2452, 0.0
  %v2455 = vld [vmem:[%s9] sm:$0xff]
  %v2456 = vld [vmem:[%s9 + $0x8] sm:$0xff]
  %v2457 = vadd.f32 %v2453, 1e-05
  %v2458 = vadd.f32 %v2454, 1e-05
  %v2459 = vrsqrt.pop %v2457
  %v2460 = vrsqrt.pop %v2458
  %v2461 = vmul.f32 %v2455, %v2459
  %v2462 = vmul.f32 %v2456, %v2460
  %v2463 = vld [vmem:[%s10] sm:$0xff]
  %v2464 = vld [vmem:[%s10 + $0x8] sm:$0xff]
  %v2465 = vmul.f32 %v2327, %v2461
  %v2466 = vmul.f32 %v2328, %v2462
  %v2467 = vsub.f32 %v2463, %v2465
  %v2468 = vsub.f32 %v2464, %v2466
  %2470 = vset.pattern.permute.xlu0 0
  %2471 = vperm.xlu0 %2470, %v2461
  %v2472 = vpop.permute.xlu0 %2471
  %2474 = vset.pattern.permute.xlu0 0
  %2475 = vperm.xlu0 %2474, %v2462
  %v2476 = vpop.permute.xlu0 %2475
  %v2477 = vlaneseq
  %v2478 = vshrl.u32 %v2477, 7
  %v2479 = vsub.s32 0, %v2478
  %v2480 = vrot.slane %v2472, %v2479
  %v2481 = vlaneseq
  %v2482 = vshrl.u32 %v2481, 7
  %v2483 = vsub.s32 1, %v2482
  %v2484 = vrot.slane %v2472, %v2483
  %v2485 = vlaneseq
  %v2486 = vshrl.u32 %v2485, 7
  %v2487 = vsub.s32 2, %v2486
  %v2488 = vrot.slane %v2472, %v2487
  %v2489 = vlaneseq
  %v2490 = vshrl.u32 %v2489, 7
  %v2491 = vsub.s32 3, %v2490
  %v2492 = vrot.slane %v2472, %v2491
  %v2493 = vlaneseq
  %v2494 = vshrl.u32 %v2493, 7
  %v2495 = vsub.s32 4, %v2494
  %v2496 = vrot.slane %v2472, %v2495
  %v2497 = vlaneseq
  %v2498 = vshrl.u32 %v2497, 7
  %v2499 = vsub.s32 5, %v2498
  %v2500 = vrot.slane %v2472, %v2499
  %v2501 = vlaneseq
  %v2502 = vshrl.u32 %v2501, 7
  %v2503 = vsub.s32 6, %v2502
  %v2504 = vrot.slane %v2472, %v2503
  %v2505 = vlaneseq
  %v2506 = vshrl.u32 %v2505, 7
  %v2507 = vsub.s32 7, %v2506
  %v2508 = vrot.slane %v2472, %v2507
  %v2509 = vlaneseq
  %v2510 = vshrl.u32 %v2509, 7
  %v2511 = vsub.s32 0, %v2510
  %v2512 = vrot.slane %v2476, %v2511
  %v2513 = vlaneseq
  %v2514 = vshrl.u32 %v2513, 7
  %v2515 = vsub.s32 1, %v2514
  %v2516 = vrot.slane %v2476, %v2515
  %v2517 = vlaneseq
  %v2518 = vshrl.u32 %v2517, 7
  %v2519 = vsub.s32 2, %v2518
  %v2520 = vrot.slane %v2476, %v2519
  %v2521 = vlaneseq
  %v2522 = vshrl.u32 %v2521, 7
  %v2523 = vsub.s32 3, %v2522
  %v2524 = vrot.slane %v2476, %v2523
  %v2525 = vlaneseq
  %v2526 = vshrl.u32 %v2525, 7
  %v2527 = vsub.s32 4, %v2526
  %v2528 = vrot.slane %v2476, %v2527
  %v2529 = vlaneseq
  %v2530 = vshrl.u32 %v2529, 7
  %v2531 = vsub.s32 5, %v2530
  %v2532 = vrot.slane %v2476, %v2531
  %v2533 = vlaneseq
  %v2534 = vshrl.u32 %v2533, 7
  %v2535 = vsub.s32 6, %v2534
  %v2536 = vrot.slane %v2476, %v2535
  %v2537 = vlaneseq
  %v2538 = vshrl.u32 %v2537, 7
  %v2539 = vsub.s32 7, %v2538
  %v2540 = vrot.slane %v2476, %v2539
  %v2557 = vmul.f32 %v2208, %v2480
  %v2558 = vmul.f32 %v2209, %v2484
  %v2559 = vmul.f32 %v2210, %v2488
  %v2560 = vmul.f32 %v2211, %v2492
  %v2561 = vmul.f32 %v2212, %v2496
  %v2562 = vmul.f32 %v2213, %v2500
  %v2563 = vmul.f32 %v2214, %v2504
  %v2564 = vmul.f32 %v2215, %v2508
  %v2565 = vmul.f32 %v2216, %v2512
  %v2566 = vmul.f32 %v2217, %v2516
  %v2567 = vmul.f32 %v2218, %v2520
  %v2568 = vmul.f32 %v2219, %v2524
  %v2569 = vmul.f32 %v2220, %v2528
  %v2570 = vmul.f32 %v2221, %v2532
  %v2571 = vmul.f32 %v2222, %v2536
  %v2572 = vmul.f32 %v2223, %v2540
  %2574 = vset.pattern.permute.xlu0 0
  %2575 = vperm.xlu0 %2574, %v2467
  %v2576 = vpop.permute.xlu0 %2575
  %2578 = vset.pattern.permute.xlu0 0
  %2579 = vperm.xlu0 %2578, %v2468
  %v2580 = vpop.permute.xlu0 %2579
  %v2581 = vlaneseq
  %v2582 = vshrl.u32 %v2581, 7
  %v2583 = vsub.s32 0, %v2582
  %v2584 = vrot.slane %v2576, %v2583
  %v2585 = vlaneseq
  %v2586 = vshrl.u32 %v2585, 7
  %v2587 = vsub.s32 1, %v2586
  %v2588 = vrot.slane %v2576, %v2587
  %v2589 = vlaneseq
  %v2590 = vshrl.u32 %v2589, 7
  %v2591 = vsub.s32 2, %v2590
  %v2592 = vrot.slane %v2576, %v2591
  %v2593 = vlaneseq
  %v2594 = vshrl.u32 %v2593, 7
  %v2595 = vsub.s32 3, %v2594
  %v2596 = vrot.slane %v2576, %v2595
  %v2597 = vlaneseq
  %v2598 = vshrl.u32 %v2597, 7
  %v2599 = vsub.s32 4, %v2598
  %v2600 = vrot.slane %v2576, %v2599
  %v2601 = vlaneseq
  %v2602 = vshrl.u32 %v2601, 7
  %v2603 = vsub.s32 5, %v2602
  %v2604 = vrot.slane %v2576, %v2603
  %v2605 = vlaneseq
  %v2606 = vshrl.u32 %v2605, 7
  %v2607 = vsub.s32 6, %v2606
  %v2608 = vrot.slane %v2576, %v2607
  %v2609 = vlaneseq
  %v2610 = vshrl.u32 %v2609, 7
  %v2611 = vsub.s32 7, %v2610
  %v2612 = vrot.slane %v2576, %v2611
  %v2613 = vlaneseq
  %v2614 = vshrl.u32 %v2613, 7
  %v2615 = vsub.s32 0, %v2614
  %v2616 = vrot.slane %v2580, %v2615
  %v2617 = vlaneseq
  %v2618 = vshrl.u32 %v2617, 7
  %v2619 = vsub.s32 1, %v2618
  %v2620 = vrot.slane %v2580, %v2619
  %v2621 = vlaneseq
  %v2622 = vshrl.u32 %v2621, 7
  %v2623 = vsub.s32 2, %v2622
  %v2624 = vrot.slane %v2580, %v2623
  %v2625 = vlaneseq
  %v2626 = vshrl.u32 %v2625, 7
  %v2627 = vsub.s32 3, %v2626
  %v2628 = vrot.slane %v2580, %v2627
  %v2629 = vlaneseq
  %v2630 = vshrl.u32 %v2629, 7
  %v2631 = vsub.s32 4, %v2630
  %v2632 = vrot.slane %v2580, %v2631
  %v2633 = vlaneseq
  %v2634 = vshrl.u32 %v2633, 7
  %v2635 = vsub.s32 5, %v2634
  %v2636 = vrot.slane %v2580, %v2635
  %v2637 = vlaneseq
  %v2638 = vshrl.u32 %v2637, 7
  %v2639 = vsub.s32 6, %v2638
  %v2640 = vrot.slane %v2580, %v2639
  %v2641 = vlaneseq
  %v2642 = vshrl.u32 %v2641, 7
  %v2643 = vsub.s32 7, %v2642
  %v2644 = vrot.slane %v2580, %v2643
  %v2661 = vadd.f32 %v2557, %v2584
  %v2662 = vadd.f32 %v2558, %v2588
  %v2663 = vadd.f32 %v2559, %v2592
  %v2664 = vadd.f32 %v2560, %v2596
  %v2665 = vadd.f32 %v2561, %v2600
  %v2666 = vadd.f32 %v2562, %v2604
  %v2667 = vadd.f32 %v2563, %v2608
  %v2668 = vadd.f32 %v2564, %v2612
  %v2669 = vadd.f32 %v2565, %v2616
  %v2670 = vadd.f32 %v2566, %v2620
  %v2671 = vadd.f32 %v2567, %v2624
  %v2672 = vadd.f32 %v2568, %v2628
  %v2673 = vadd.f32 %v2569, %v2632
  %v2674 = vadd.f32 %v2570, %v2636
  %v2675 = vadd.f32 %v2571, %v2640
  %v2676 = vadd.f32 %v2572, %v2644
  %2693 = vset.pattern.permute.xlu0 0
  %2694 = vperm.xlu0 %2693, %v2661
  %v2695 = vpop.permute.xlu0 %2694
  %2696 = vset.pattern.permute.xlu0 0
  %2697 = vperm.xlu0 %2696, %v2662
  %v2698 = vpop.permute.xlu0 %2697
  %2699 = vset.pattern.permute.xlu0 0
  %2700 = vperm.xlu0 %2699, %v2663
  %v2701 = vpop.permute.xlu0 %2700
  %2702 = vset.pattern.permute.xlu0 0
  %2703 = vperm.xlu0 %2702, %v2664
  %v2704 = vpop.permute.xlu0 %2703
  %2705 = vset.pattern.permute.xlu0 0
  %2706 = vperm.xlu0 %2705, %v2665
  %v2707 = vpop.permute.xlu0 %2706
  %2708 = vset.pattern.permute.xlu0 0
  %2709 = vperm.xlu0 %2708, %v2666
  %v2710 = vpop.permute.xlu0 %2709
  %2711 = vset.pattern.permute.xlu0 0
  %2712 = vperm.xlu0 %2711, %v2667
  %v2713 = vpop.permute.xlu0 %2712
  %2714 = vset.pattern.permute.xlu0 0
  %2715 = vperm.xlu0 %2714, %v2668
  %v2716 = vpop.permute.xlu0 %2715
  %2717 = vset.pattern.permute.xlu0 0
  %2718 = vperm.xlu0 %2717, %v2669
  %v2719 = vpop.permute.xlu0 %2718
  %2720 = vset.pattern.permute.xlu0 0
  %2721 = vperm.xlu0 %2720, %v2670
  %v2722 = vpop.permute.xlu0 %2721
  %2723 = vset.pattern.permute.xlu0 0
  %2724 = vperm.xlu0 %2723, %v2671
  %v2725 = vpop.permute.xlu0 %2724
  %2726 = vset.pattern.permute.xlu0 0
  %2727 = vperm.xlu0 %2726, %v2672
  %v2728 = vpop.permute.xlu0 %2727
  %2729 = vset.pattern.permute.xlu0 0
  %2730 = vperm.xlu0 %2729, %v2673
  %v2731 = vpop.permute.xlu0 %2730
  %2732 = vset.pattern.permute.xlu0 0
  %2733 = vperm.xlu0 %2732, %v2674
  %v2734 = vpop.permute.xlu0 %2733
  %2735 = vset.pattern.permute.xlu0 0
  %2736 = vperm.xlu0 %2735, %v2675
  %v2737 = vpop.permute.xlu0 %2736
  %2738 = vset.pattern.permute.xlu0 0
  %2739 = vperm.xlu0 %2738, %v2676
  %v2740 = vpop.permute.xlu0 %2739
  %v2741 = vlaneseq
  %v2742 = vshrl.u32 %v2741, 7
  %v2743 = vsub.s32 %v668, %v2742
  %v2744 = vrot.slane %v2695, %v2743
  %v2745 = vlaneseq
  %v2746 = vshrl.u32 %v2745, 7
  %v2747 = vsub.s32 %v668, %v2746
  %v2748 = vrot.slane %v2698, %v2747
  %v2749 = vlaneseq
  %v2750 = vshrl.u32 %v2749, 7
  %v2751 = vsub.s32 %v668, %v2750
  %v2752 = vrot.slane %v2701, %v2751
  %v2753 = vlaneseq
  %v2754 = vshrl.u32 %v2753, 7
  %v2755 = vsub.s32 %v668, %v2754
  %v2756 = vrot.slane %v2704, %v2755
  %v2757 = vlaneseq
  %v2758 = vshrl.u32 %v2757, 7
  %v2759 = vsub.s32 %v668, %v2758
  %v2760 = vrot.slane %v2707, %v2759
  %v2761 = vlaneseq
  %v2762 = vshrl.u32 %v2761, 7
  %v2763 = vsub.s32 %v668, %v2762
  %v2764 = vrot.slane %v2710, %v2763
  %v2765 = vlaneseq
  %v2766 = vshrl.u32 %v2765, 7
  %v2767 = vsub.s32 %v668, %v2766
  %v2768 = vrot.slane %v2713, %v2767
  %v2769 = vlaneseq
  %v2770 = vshrl.u32 %v2769, 7
  %v2771 = vsub.s32 %v668, %v2770
  %v2772 = vrot.slane %v2716, %v2771
  %v2773 = vlaneseq
  %v2774 = vshrl.u32 %v2773, 7
  %v2775 = vsub.s32 %v668, %v2774
  %v2776 = vrot.slane %v2719, %v2775
  %v2777 = vlaneseq
  %v2778 = vshrl.u32 %v2777, 7
  %v2779 = vsub.s32 %v668, %v2778
  %v2780 = vrot.slane %v2722, %v2779
  %v2781 = vlaneseq
  %v2782 = vshrl.u32 %v2781, 7
  %v2783 = vsub.s32 %v668, %v2782
  %v2784 = vrot.slane %v2725, %v2783
  %v2785 = vlaneseq
  %v2786 = vshrl.u32 %v2785, 7
  %v2787 = vsub.s32 %v668, %v2786
  %v2788 = vrot.slane %v2728, %v2787
  %v2789 = vlaneseq
  %v2790 = vshrl.u32 %v2789, 7
  %v2791 = vsub.s32 %v668, %v2790
  %v2792 = vrot.slane %v2731, %v2791
  %v2793 = vlaneseq
  %v2794 = vshrl.u32 %v2793, 7
  %v2795 = vsub.s32 %v668, %v2794
  %v2796 = vrot.slane %v2734, %v2795
  %v2797 = vlaneseq
  %v2798 = vshrl.u32 %v2797, 7
  %v2799 = vsub.s32 %v668, %v2798
  %v2800 = vrot.slane %v2737, %v2799
  %v2801 = vlaneseq
  %v2802 = vshrl.u32 %v2801, 7
  %v2803 = vsub.s32 %v668, %v2802
  %v2804 = vrot.slane %v2740, %v2803
  %v2805 = vsel %vm743, %v2748, %v2744
  %v2806 = vsel %vm745, %v2752, %v2805
  %v2807 = vsel %vm747, %v2756, %v2806
  %v2808 = vsel %vm749, %v2760, %v2807
  %v2809 = vsel %vm751, %v2764, %v2808
  %v2810 = vsel %vm753, %v2768, %v2809
  %v2811 = vsel %vm755, %v2772, %v2810
  %v2812 = vsel %vm743, %v2780, %v2776
  %v2813 = vsel %vm745, %v2784, %v2812
  %v2814 = vsel %vm747, %v2788, %v2813
  %v2815 = vsel %vm749, %v2792, %v2814
  %v2816 = vsel %vm751, %v2796, %v2815
  %v2817 = vsel %vm753, %v2800, %v2816
  %v2818 = vsel %vm755, %v2804, %v2817
  %2821 = vst.msk [vmem:[%s11] sm:$0xff] %vm2320, %v2811
  %2822 = vst.msk [vmem:[%s11 + $0x8] sm:$0xff] %vm2320, %v2818
  // Predicated region
  $region46: #{tpu_custom_call.1} parent=0 // pred_check
    _
  $region47: #{tpu_custom_call.1} parent=0 // pred_check_branch
    %2824 = sbr.rel (0) target = $region49
  $region48: #{tpu_custom_call.1} parent=0 // pred_region
    _
  $region49: #{tpu_custom_call.1} parent=0 // pred_fallthru
    _
  // Predicated region
  $region50: #{tpu_custom_call.1} parent=0 // pred_check
    _
  $region51: #{tpu_custom_call.1} parent=0 // pred_check_branch
    %2826 = sbr.rel (0) target = $region53
  $region52: #{tpu_custom_call.1} parent=0 // pred_region
    _
  $region53: #{tpu_custom_call.1} parent=0 // pred_fallthru
    _

</llo_original>
